<compile_context>
chip_gen: v6e
topology: v6e:2x2x1
jax: 0.10.0
libtpu: 0.0.40
codegen_flags: <defaults>
</compile_context>

<pallas_src>
import functools

import jax
import jax.numpy as jnp
from jax.experimental import pallas as pl
from jax.experimental.pallas import tpu as pltpu


def _round_up(x, m):
    return ((x + m - 1) // m) * m


def _choose_tile(n, max_tile):
    """Spatial row tile: largest multiple of 8 <= max_tile dividing n; else pad n."""
    max_tile = max(8, (max_tile // 8) * 8)
    cap = min(n, max_tile)
    best = 0
    t = 8
    while t <= cap:
        if n % t == 0:
            best = t
        t += 8
    if best >= max(8, cap // 2):
        return best, n                          # clean divisor tile, no padding
    tile = min(max_tile, _round_up(n, 8))
    return tile, _round_up(n, tile)             # zero-pad n up to a tile multiple


# ---------------------------------------------------------------------------
# Conv3d (no bias) + fused GroupNorm partial statistics
#   A_kd : (1, 1, tile, k*k*Ci) bf16  (k depth-shifted views of the row-patch tensor)
#   B    : (k, k*k*Ci, Op)      bf16  (fully VMEM resident)
#   Y    : (1, 1, tile, Op)     bf16
#   ST   : (1, 1, 1, 8, Op)     f32   rows 0/1 = per-tile per-channel sum / sum(x^2)
# ---------------------------------------------------------------------------
def _conv_gn_gemm_kernel(*refs, k):
    a_refs = refs[:k]
    b_ref = refs[k]
    y_ref = refs[k + 1]
    st_ref = refs[k + 2]

    acc = jnp.dot(a_refs[0][0, 0], b_ref[0], preferred_element_type=jnp.float32)
    for kd in range(1, k):
        acc = acc + jnp.dot(a_refs[kd][0, 0], b_ref[kd],
                            preferred_element_type=jnp.float32)

    y_ref[0, 0] = acc.astype(y_ref.dtype)

    # Fused GroupNorm partial statistics (computed from the f32 accumulator).
    s = jnp.sum(acc, axis=0, keepdims=True)            # (1, Op)
    q = jnp.sum(acc * acc, axis=0, keepdims=True)      # (1, Op)
    rows = jax.lax.broadcasted_iota(jnp.int32, (8, acc.shape[1]), 0)
    st = jnp.where(rows == 0, jnp.broadcast_to(s, rows.shape),
                   jnp.where(rows == 1, jnp.broadcast_to(q, rows.shape), 0.0))
    st_ref[0, 0, 0] = st


def conv3d_gn_stats_cl(x_cl, w, stride, pad, *, vmem_budget=22 * 1024 * 1024):
    """Channels-last conv (bf16 MXU, f32 acc) with fused per-tile GN statistics.

    x_cl: (N, D, H, W, Ci), w: (O, Ci, k, k, k).
    Returns y (N, Do, S2p, Op) bf16, stats (N, Do, T, 8, Op) f32, dims tuple.
    """
    N, D, H, W, Ci = x_cl.shape
    O, Ci2, k, k2, k3 = w.shape
    assert Ci == Ci2 and k == k2 == k3

    xb = x_cl.astype(jnp.bfloat16)
    xp = jnp.pad(xb, ((0, 0), (pad, pad), (pad, pad), (pad, pad), (0, 0)))
    Dp = D + 2 * pad
    Do = (D + 2 * pad - k) // stride + 1
    Ho = (H + 2 * pad - k) // stride + 1
    Wo = (W + 2 * pad - k) // stride + 1

    # Partial im2col: fold only the H/W taps into the last dim (k^2 * Ci columns).
    cols = []
    for kh in range(k):
        for kw in range(k):
            cols.append(xp[:, :, kh:kh + stride * Ho:stride,
                           kw:kw + stride * Wo:stride, :])
    P = jnp.concatenate(cols, axis=-1)                  # (N, Dp, Ho, Wo, k*k*Ci)
    KC = k * k * Ci
    S2 = Ho * Wo
    P = P.reshape(N, Dp, S2, KC)

    Op = _round_up(O, 128)                              # lane-dense output channels

    # Weight matrix, fully VMEM-resident: (k, k*k*Ci, Op) bf16, fetched once.
    wmat = jnp.transpose(w, (2, 3, 4, 1, 0)).reshape(k, KC, O).astype(jnp.bfloat16)
    wmat = jnp.pad(wmat, ((0, 0), (0, 0), (0, Op - O)))

    # Tile from a VMEM budget: k inputs double-buffered + resident B + output buffers.
    fixed = 4 * k * KC * Op + 64 * Op + (1 << 20)
    per_row = 4 * k * KC + 4 * Op + 32
    max_rows = max(8, (vmem_budget - fixed) // per_row)
    tile, S2p = _choose_tile(S2, min(512, max_rows))
    if S2p != S2:
        P = jnp.pad(P, ((0, 0), (0, 0), (0, S2p - S2), (0, 0)))   # zero rows: stats-safe
    T = S2p // tile

    def _a_index(kd):
        # depth block size is 1, so the returned block index IS the element offset
        return lambda n, do, t: (n, stride * do + kd, t, 0)

    a_specs = [pl.BlockSpec((1, 1, tile, KC), _a_index(kd)) for kd in range(k)]
    b_spec = pl.BlockSpec((k, KC, Op), lambda n, do, t: (0, 0, 0))
    y_spec = pl.BlockSpec((1, 1, tile, Op), lambda n, do, t: (n, do, t, 0))
    st_spec = pl.BlockSpec((1, 1, 1, 8, Op), lambda n, do, t: (n, do, t, 0, 0))

    flops = 2 * N * Do * S2p * KC * Op * k
    bytes_accessed = (k * N * Do * S2p * KC * 2 + k * KC * Op * 2
                      + N * Do * S2p * Op * 2 + N * Do * T * 8 * Op * 4)

    y, st = pl.pallas_call(
        functools.partial(_conv_gn_gemm_kernel, k=k),
        out_shape=(jax.ShapeDtypeStruct((N, Do, S2p, Op), jnp.bfloat16),
                   jax.ShapeDtypeStruct((N, Do, T, 8, Op), jnp.float32)),
        grid=(N, Do, T),
        in_specs=a_specs + [b_spec],
        out_specs=(y_spec, st_spec),
        compiler_params=pltpu.CompilerParams(
            dimension_semantics=("parallel", "parallel", "parallel"),
            vmem_limit_bytes=40 * 1024 * 1024),
        cost_estimate=pl.CostEstimate(flops=int(flops), transcendentals=0,
                                      bytes_accessed=int(bytes_accessed)),
    )(*([P] * k + [wmat]))

    return y, st, (Do, Ho, Wo, O, Op, S2, S2p, tile)


# ---------------------------------------------------------------------------
# GroupNorm normalize (affine folded into per-channel scale/shift) + LeakyReLU
# ---------------------------------------------------------------------------
def _norm_act_kernel(y_ref, sc_ref, sh_ref, o_ref, *, slope, apply_act):
    v = y_ref[0, 0].astype(jnp.float32)                 # (tile, Op)
    v = v * sc_ref[0, 0] + sh_ref[0, 0]                 # (1, Op) broadcast
    if apply_act:
        v = jnp.where(v >= 0, v, v * slope)             # LeakyReLU(slope)
    o_ref[0, 0] = v.astype(o_ref.dtype)


def group_norm_act_cl(y, st, gamma, beta, *, num_groups, dims, eps, slope,
                      apply_act, out_dtype):
    N = y.shape[0]
    Do, Ho, Wo, O, Op, S2, S2p, tile = dims
    T = S2p // tile
    G = num_groups
    cg = O // G
    S = Do * Ho * Wo

    # Two-level reduction of the fused per-tile partials (tiny, done by XLA).
    sums = st[:, :, :, 0, :O].sum(axis=(1, 2))          # (N, O)
    sqs = st[:, :, :, 1, :O].sum(axis=(1, 2))           # (N, O)
    gs = sums.reshape(N, G, cg).sum(-1)                 # (N, G)
    gq = sqs.reshape(N, G, cg).sum(-1)
    cnt = float(cg * S)
    mean = gs / cnt
    var = jnp.maximum(gq / cnt - mean * mean, 0.0)      # clamp one-pass cancellation
    inv = jax.lax.rsqrt(var + eps)
    mean_c = jnp.repeat(mean, cg, axis=1)               # (N, O)
    inv_c = jnp.repeat(inv, cg, axis=1)
    scale = inv_c * gamma[None, :].astype(jnp.float32)  # gamma/beta folded in
    shift = beta[None, :].astype(jnp.float32) - mean_c * scale
    scale = jnp.pad(scale, ((0, 0), (0, Op - O))).reshape(N, 1, 1, Op)
    shift = jnp.pad(shift, ((0, 0), (0, Op - O))).reshape(N, 1, 1, Op)

    flops = 4 * N * Do * S2p * Op
    bytes_accessed = (N * Do * S2p * Op * (2 + jnp.dtype(out_dtype).itemsize)
                      + 2 * N * Op * 4)

    out = pl.pallas_call(
        functools.partial(_norm_act_kernel, slope=slope, apply_act=apply_act),
        out_shape=jax.ShapeDtypeStruct((N, Do, S2p, Op), out_dtype),
        grid=(N, Do, T),
        in_specs=[pl.BlockSpec((1, 1, tile, Op), lambda n, do, t: (n, do, t, 0)),
                  pl.BlockSpec((1, 1, 1, Op), lambda n, do, t: (n, 0, 0, 0)),
                  pl.BlockSpec((1, 1, 1, Op), lambda n, do, t: (n, 0, 0, 0))],
        out_specs=pl.BlockSpec((1, 1, tile, Op), lambda n, do, t: (n, do, t, 0)),
        compiler_params=pltpu.CompilerParams(
            dimension_semantics=("parallel", "parallel", "parallel"),
            vmem_limit_bytes=40 * 1024 * 1024),
        cost_estimate=pl.CostEstimate(flops=int(flops), transcendentals=0,
                                      bytes_accessed=int(bytes_accessed)),
    )(y, scale, shift)
    return out


# ---------------------------------------------------------------------------
# convNormAct forward (norm_type='GN' -> GroupNorm with 2 groups)
# ---------------------------------------------------------------------------
def conv_norm_act_pallas(x, w, gamma, beta, *, num_groups=2, stride=1, padding=1,
                         is_act=True, eps=1e-5, slope=0.1, out_dtype=None):
    if out_dtype is None:
        out_dtype = x.dtype          # pass jnp.bfloat16 here to halve the final writeback
    N = x.shape[0]
    x_cl = jnp.transpose(x, (0, 2, 3, 4, 1))            # single NCDHW -> NDHWC
    y, st, dims = conv3d_gn_stats_cl(x_cl, w, stride, padding)
    Do, Ho, Wo, O, Op, S2, S2p, tile = dims
    out = group_norm_act_cl(y, st, gamma, beta, num_groups=num_groups, dims=dims,
                            eps=eps, slope=slope, apply_act=is_act,
                            out_dtype=out_dtype)
    out = out[:, :, :S2, :O].reshape(N, Do, Ho, Wo, O)
    return jnp.transpose(out, (0, 4, 1, 2, 3))          # single NDHWC -> NCDHW


# ---------------------------------------------------------------------------
# Pure-JAX reference (mirrors the deliberate bf16 roundings of the kernels)
# ---------------------------------------------------------------------------
def _forward_reference(x, w, gamma, beta, *, num_groups=2, stride=1, padding=1,
                       is_act=True, eps=1e-5, slope=0.1):
    xb = x.astype(jnp.bfloat16).astype(jnp.float32)
    wb = w.astype(jnp.bfloat16).astype(jnp.float32)
    y = jax.lax.conv_general_dilated(
        xb, wb, (stride,) * 3, [(padding, padding)] * 3,
        dimension_numbers=('NCDHW', 'OIDHW', 'NCDHW'))
    y = y.astype(jnp.bfloat16).astype(jnp.float32)      # kernel emits conv in bf16
    N, C = y.shape[:2]
    yr = y.reshape(N, num_groups, -1)
    m = yr.mean(axis=2, keepdims=True)
    v = jnp.mean((yr - m) ** 2, axis=2, keepdims=True)
    yn = ((yr - m) * jax.lax.rsqrt(v + eps)).reshape(y.shape)
    out = yn * gamma.reshape(1, C, 1, 1, 1) + beta.reshape(1, C, 1, 1, 1)
    if is_act:
        out = jnp.where(out >= 0, out, slope * out)
    return out


if __name__ == "__main__":
    key = jax.random.PRNGKey(0)
    k1, k2, k3, k4 = jax.random.split(key, 4)

    # convNormAct(in_cs=4, out_cs=8, norm_type='GN', kernel_size=3, ...)
    N, in_cs, out_cs = 2, 4, 8
    D = H = W = 16

    x = jax.random.normal(k1, (N, in_cs, D, H, W), jnp.float32)
    w = 0.1 * jax.random.normal(k2, (out_cs, in_cs, 3, 3, 3), jnp.float32)
    gamma = 1.0 + 0.1 * jax.random.normal(k3, (out_cs,), jnp.float32)
    beta = 0.1 * jax.random.normal(k4, (out_cs,), jnp.float32)

    fwd = jax.jit(conv_norm_act_pallas,
                  static_argnames=("num_groups", "stride", "padding", "is_act",
                                   "eps", "slope", "out_dtype"))

    configs = [
        dict(stride=1, padding=1, is_act=True),    # standard conv + GN + LeakyReLU
        dict(stride=2, padding=1, is_act=False),   # strided conv + GN, no activation
    ]
    for cfg in configs:
        out = fwd(x, w, gamma, beta, num_groups=2, **cfg)
        out = jax.block_until_ready(out)
        ref = _forward_reference(x, w, gamma, beta, num_groups=2, **cfg)
        assert out.shape == ref.shape, (out.shape, ref.shape)
        max_err = float(jnp.max(jnp.abs(out - ref)))
        assert max_err < 2e-2, f"max abs err {max_err} (cfg={cfg})"

    print("KERNEL_OK")
</pallas_src>

<mosaic_0001>
module attributes {stable_mosaic.version = 11 : i64} {
  func.func @_conv_gn_gemm_kernel(%arg0: i32, %arg1: i32, %arg2: i32, %arg3: memref<1x1x256x36xbf16, #tpu.memory_space<vmem>>, %arg4: memref<1x1x256x36xbf16, #tpu.memory_space<vmem>>, %arg5: memref<1x1x256x36xbf16, #tpu.memory_space<vmem>>, %arg6: memref<3x36x128xbf16, #tpu.memory_space<vmem>>, %arg7: memref<1x1x256x128xbf16, #tpu.memory_space<vmem>>, %arg8: memref<1x1x1x8x128xf32, #tpu.memory_space<vmem>>) attributes {dimension_semantics = [#tpu.dimension_semantics<parallel>, #tpu.dimension_semantics<parallel>, #tpu.dimension_semantics<parallel>], iteration_bounds = array<i64: 2, 16, 1>, scalar_prefetch = 0 : i64, scratch_operands = 0 : i64, tpu.core_type = #tpu.core_type<tc>, window_params = [{transform_indices = @transform_0, window_bounds = array<i64: 1, 1, 256, 36>}, {transform_indices = @transform_1, window_bounds = array<i64: 1, 1, 256, 36>}, {transform_indices = @transform_2, window_bounds = array<i64: 1, 1, 256, 36>}, {pipeline_mode = #tpu.pipeline_mode<synchronous>, transform_indices = @transform_3, window_bounds = array<i64: 3, 36, 128>}, {transform_indices = @transform_4, window_bounds = array<i64: 1, 1, 256, 128>}, {transform_indices = @transform_5, window_bounds = array<i64: 1, 1, 1, 8, 128>}]} {
    %c0 = arith.constant 0 : index
    %c0_0 = arith.constant 0 : index
    %c0_1 = arith.constant 0 : index
    %c0_2 = arith.constant 0 : index
    %0 = vector.load %arg3[%c0, %c0_0, %c0_1, %c0_2] : memref<1x1x256x36xbf16, #tpu.memory_space<vmem>>, vector<1x1x256x36xbf16>
    %1 = vector.shape_cast %0 : vector<1x1x256x36xbf16> to vector<256x36xbf16>
    %c0_3 = arith.constant 0 : index
    %c0_4 = arith.constant 0 : index
    %c0_5 = arith.constant 0 : index
    %2 = vector.load %arg6[%c0_3, %c0_4, %c0_5] : memref<3x36x128xbf16, #tpu.memory_space<vmem>>, vector<1x36x128xbf16>
    %3 = vector.shape_cast %2 : vector<1x36x128xbf16> to vector<36x128xbf16>
    %cst = arith.constant dense<0.000000e+00> : vector<256x128xf32>
    %4 = tpu.matmul %1, %3, %cst {dimension_numbers = #tpu.dot_dimension_numbers<[1], [0], [0], [1], [0, 0, 1, 1], [], []>} : vector<256x36xbf16>, vector<36x128xbf16>, vector<256x128xf32> -> vector<256x128xf32>
    %c0_6 = arith.constant 0 : index
    %c0_7 = arith.constant 0 : index
    %c0_8 = arith.constant 0 : index
    %c0_9 = arith.constant 0 : index
    %5 = vector.load %arg4[%c0_6, %c0_7, %c0_8, %c0_9] : memref<1x1x256x36xbf16, #tpu.memory_space<vmem>>, vector<1x1x256x36xbf16>
    %6 = vector.shape_cast %5 : vector<1x1x256x36xbf16> to vector<256x36xbf16>
    %c1 = arith.constant 1 : index
    %c0_10 = arith.constant 0 : index
    %c0_11 = arith.constant 0 : index
    %7 = vector.load %arg6[%c1, %c0_10, %c0_11] : memref<3x36x128xbf16, #tpu.memory_space<vmem>>, vector<1x36x128xbf16>
    %8 = vector.shape_cast %7 : vector<1x36x128xbf16> to vector<36x128xbf16>
    %cst_12 = arith.constant dense<0.000000e+00> : vector<256x128xf32>
    %9 = tpu.matmul %6, %8, %cst_12 {dimension_numbers = #tpu.dot_dimension_numbers<[1], [0], [0], [1], [0, 0, 1, 1], [], []>} : vector<256x36xbf16>, vector<36x128xbf16>, vector<256x128xf32> -> vector<256x128xf32>
    %10 = arith.addf %4, %9 : vector<256x128xf32>
    %c0_13 = arith.constant 0 : index
    %c0_14 = arith.constant 0 : index
    %c0_15 = arith.constant 0 : index
    %c0_16 = arith.constant 0 : index
    %11 = vector.load %arg5[%c0_13, %c0_14, %c0_15, %c0_16] : memref<1x1x256x36xbf16, #tpu.memory_space<vmem>>, vector<1x1x256x36xbf16>
    %12 = vector.shape_cast %11 : vector<1x1x256x36xbf16> to vector<256x36xbf16>
    %c2 = arith.constant 2 : index
    %c0_17 = arith.constant 0 : index
    %c0_18 = arith.constant 0 : index
    %13 = vector.load %arg6[%c2, %c0_17, %c0_18] : memref<3x36x128xbf16, #tpu.memory_space<vmem>>, vector<1x36x128xbf16>
    %14 = vector.shape_cast %13 : vector<1x36x128xbf16> to vector<36x128xbf16>
    %cst_19 = arith.constant dense<0.000000e+00> : vector<256x128xf32>
    %15 = tpu.matmul %12, %14, %cst_19 {dimension_numbers = #tpu.dot_dimension_numbers<[1], [0], [0], [1], [0, 0, 1, 1], [], []>} : vector<256x36xbf16>, vector<36x128xbf16>, vector<256x128xf32> -> vector<256x128xf32>
    %16 = arith.addf %10, %15 : vector<256x128xf32>
    %17 = arith.truncf %16 : vector<256x128xf32> to vector<256x128xbf16>
    %c0_20 = arith.constant 0 : index
    %c0_21 = arith.constant 0 : index
    %c0_22 = arith.constant 0 : index
    %c0_23 = arith.constant 0 : index
    %18 = vector.load %arg7[%c0_20, %c0_21, %c0_22, %c0_23] : memref<1x1x256x128xbf16, #tpu.memory_space<vmem>>, vector<1x1x256x128xbf16>
    %19 = vector.shape_cast %18 : vector<1x1x256x128xbf16> to vector<256x128xbf16>
    %20 = vector.shape_cast %17 : vector<256x128xbf16> to vector<1x1x256x128xbf16>
    tpu.vector_store %arg7[%c0_20, %c0_21, %c0_22, %c0_23], %20 {strides = array<i32>} : memref<1x1x256x128xbf16, #tpu.memory_space<vmem>>, vector<1x1x256x128xbf16>,
    %cst_24 = arith.constant dense<0.000000e+00> : vector<128xf32>
    %21 = vector.multi_reduction <add>, %16, %cst_24 [0] : vector<256x128xf32> to vector<128xf32>
    %22 = vector.shape_cast %21 : vector<128xf32> to vector<1x128xf32>
    %23 = arith.mulf %16, %16 : vector<256x128xf32>
    %cst_25 = arith.constant dense<0.000000e+00> : vector<128xf32>
    %24 = vector.multi_reduction <add>, %23, %cst_25 [0] : vector<256x128xf32> to vector<128xf32>
    %25 = vector.shape_cast %24 : vector<128xf32> to vector<1x128xf32>
    %26 = tpu.iota {dimensions = array<i32: 0>} : vector<8x128xi32>
    %c0_i32 = arith.constant 0 : i32
    %27 = vector.broadcast %c0_i32 : i32 to vector<8x128xi32>
    %28 = arith.cmpi eq, %26, %27 : vector<8x128xi32>
    %29 = vector.shape_cast %22 : vector<1x128xf32> to vector<1x128xf32>
    %30 = vector.broadcast %29 : vector<1x128xf32> to vector<8x128xf32>
    %c1_i32 = arith.constant 1 : i32
    %31 = vector.broadcast %c1_i32 : i32 to vector<8x128xi32>
    %32 = arith.cmpi eq, %26, %31 : vector<8x128xi32>
    %33 = vector.shape_cast %25 : vector<1x128xf32> to vector<1x128xf32>
    %34 = vector.broadcast %33 : vector<1x128xf32> to vector<8x128xf32>
    %cst_26 = arith.constant 0.000000e+00 : f32
    %35 = vector.broadcast %cst_26 : f32 to vector<8x128xf32>
    %36 = arith.select %32, %34, %35 : vector<8x128xi1>, vector<8x128xf32>
    %37 = arith.select %28, %30, %36 : vector<8x128xi1>, vector<8x128xf32>
    %c0_27 = arith.constant 0 : index
    %c0_28 = arith.constant 0 : index
    %c0_29 = arith.constant 0 : index
    %c0_30 = arith.constant 0 : index
    %c0_31 = arith.constant 0 : index
    %38 = vector.load %arg8[%c0_27, %c0_28, %c0_29, %c0_30, %c0_31] : memref<1x1x1x8x128xf32, #tpu.memory_space<vmem>>, vector<1x1x1x8x128xf32>
    %39 = vector.shape_cast %38 : vector<1x1x1x8x128xf32> to vector<8x128xf32>
    %40 = vector.shape_cast %37 : vector<8x128xf32> to vector<1x1x1x8x128xf32>
    tpu.vector_store %arg8[%c0_27, %c0_28, %c0_29, %c0_30, %c0_31], %40 {strides = array<i32>} : memref<1x1x1x8x128xf32, #tpu.memory_space<vmem>>, vector<1x1x1x8x128xf32>,
    return
  }
  func.func @transform_0(%arg0: i32, %arg1: i32, %arg2: i32) -> (i32, i32, i32, i32) {
    %c1_i32 = arith.constant 1 : i32
    %0 = arith.muli %c1_i32, %arg1 : i32
    %c0_i32 = arith.constant 0 : i32
    %1 = arith.addi %0, %c0_i32 : i32
    %c0_i32_0 = arith.constant 0 : i32
    %c0_i32_1 = arith.constant 0 : i32
    return %arg0, %1, %arg2, %c0_i32_0 : i32, i32, i32, i32
  }
  func.func @transform_1(%arg0: i32, %arg1: i32, %arg2: i32) -> (i32, i32, i32, i32) {
    %c1_i32 = arith.constant 1 : i32
    %0 = arith.muli %c1_i32, %arg1 : i32
    %c1_i32_0 = arith.constant 1 : i32
    %1 = arith.addi %0, %c1_i32_0 : i32
    %c0_i32 = arith.constant 0 : i32
    %c0_i32_1 = arith.constant 0 : i32
    return %arg0, %1, %arg2, %c0_i32 : i32, i32, i32, i32
  }
  func.func @transform_2(%arg0: i32, %arg1: i32, %arg2: i32) -> (i32, i32, i32, i32) {
    %c1_i32 = arith.constant 1 : i32
    %0 = arith.muli %c1_i32, %arg1 : i32
    %c2_i32 = arith.constant 2 : i32
    %1 = arith.addi %0, %c2_i32 : i32
    %c0_i32 = arith.constant 0 : i32
    %c0_i32_0 = arith.constant 0 : i32
    return %arg0, %1, %arg2, %c0_i32 : i32, i32, i32, i32
  }
  func.func @transform_3(%arg0: i32, %arg1: i32, %arg2: i32) -> (i32, i32, i32) {
    %c0_i32 = arith.constant 0 : i32
    %c0_i32_0 = arith.constant 0 : i32
    %c0_i32_1 = arith.constant 0 : i32
    %c0_i32_2 = arith.constant 0 : i32
    return %c0_i32, %c0_i32_0, %c0_i32_1 : i32, i32, i32
  }
  func.func @transform_4(%arg0: i32, %arg1: i32, %arg2: i32) -> (i32, i32, i32, i32) {
    %c0_i32 = arith.constant 0 : i32
    %c0_i32_0 = arith.constant 0 : i32
    return %arg0, %arg1, %arg2, %c0_i32 : i32, i32, i32, i32
  }
  func.func @transform_5(%arg0: i32, %arg1: i32, %arg2: i32) -> (i32, i32, i32, i32, i32) {
    %c0_i32 = arith.constant 0 : i32
    %c0_i32_0 = arith.constant 0 : i32
    %c0_i32_1 = arith.constant 0 : i32
    return %arg0, %arg1, %arg2, %c0_i32, %c0_i32_0 : i32, i32, i32, i32, i32
  }
}

module attributes {stable_mosaic.version = 11 : i64} {
  func.func @_norm_act_kernel(%arg0: i32, %arg1: i32, %arg2: i32, %arg3: memref<1x1x256x128xbf16, #tpu.memory_space<vmem>>, %arg4: memref<1x1x1x128xf32, #tpu.memory_space<vmem>>, %arg5: memref<1x1x1x128xf32, #tpu.memory_space<vmem>>, %arg6: memref<1x1x256x128xf32, #tpu.memory_space<vmem>>) attributes {dimension_semantics = [#tpu.dimension_semantics<parallel>, #tpu.dimension_semantics<parallel>, #tpu.dimension_semantics<parallel>], iteration_bounds = array<i64: 2, 16, 1>, scalar_prefetch = 0 : i64, scratch_operands = 0 : i64, tpu.core_type = #tpu.core_type<tc>, window_params = [{transform_indices = @transform_0, window_bounds = array<i64: 1, 1, 256, 128>}, {transform_indices = @transform_1, window_bounds = array<i64: 1, 1, 1, 128>}, {transform_indices = @transform_2, window_bounds = array<i64: 1, 1, 1, 128>}, {transform_indices = @transform_3, window_bounds = array<i64: 1, 1, 256, 128>}]} {
    %c0 = arith.constant 0 : index
    %c0_0 = arith.constant 0 : index
    %c0_1 = arith.constant 0 : index
    %c0_2 = arith.constant 0 : index
    %0 = vector.load %arg3[%c0, %c0_0, %c0_1, %c0_2] : memref<1x1x256x128xbf16, #tpu.memory_space<vmem>>, vector<1x1x256x128xbf16>
    %1 = vector.shape_cast %0 : vector<1x1x256x128xbf16> to vector<256x128xbf16>
    %2 = arith.extf %1 : vector<256x128xbf16> to vector<256x128xf32>
    %c0_3 = arith.constant 0 : index
    %c0_4 = arith.constant 0 : index
    %c0_5 = arith.constant 0 : index
    %c0_6 = arith.constant 0 : index
    %3 = vector.load %arg4[%c0_3, %c0_4, %c0_5, %c0_6] : memref<1x1x1x128xf32, #tpu.memory_space<vmem>>, vector<1x1x1x128xf32>
    %4 = vector.shape_cast %3 : vector<1x1x1x128xf32> to vector<1x128xf32>
    %5 = vector.broadcast %4 : vector<1x128xf32> to vector<256x128xf32>
    %6 = arith.mulf %2, %5 : vector<256x128xf32>
    %c0_7 = arith.constant 0 : index
    %c0_8 = arith.constant 0 : index
    %c0_9 = arith.constant 0 : index
    %c0_10 = arith.constant 0 : index
    %7 = vector.load %arg5[%c0_7, %c0_8, %c0_9, %c0_10] : memref<1x1x1x128xf32, #tpu.memory_space<vmem>>, vector<1x1x1x128xf32>
    %8 = vector.shape_cast %7 : vector<1x1x1x128xf32> to vector<1x128xf32>
    %9 = vector.broadcast %8 : vector<1x128xf32> to vector<256x128xf32>
    %10 = arith.addf %6, %9 : vector<256x128xf32>
    %cst = arith.constant 0.000000e+00 : f32
    %11 = vector.broadcast %cst : f32 to vector<256x128xf32>
    %12 = arith.cmpf oge, %10, %11 : vector<256x128xf32>
    %cst_11 = arith.constant 1.000000e-01 : f32
    %13 = vector.broadcast %cst_11 : f32 to vector<256x128xf32>
    %14 = arith.mulf %10, %13 : vector<256x128xf32>
    %15 = arith.select %12, %10, %14 : vector<256x128xi1>, vector<256x128xf32>
    %c0_12 = arith.constant 0 : index
    %c0_13 = arith.constant 0 : index
    %c0_14 = arith.constant 0 : index
    %c0_15 = arith.constant 0 : index
    %16 = vector.load %arg6[%c0_12, %c0_13, %c0_14, %c0_15] : memref<1x1x256x128xf32, #tpu.memory_space<vmem>>, vector<1x1x256x128xf32>
    %17 = vector.shape_cast %16 : vector<1x1x256x128xf32> to vector<256x128xf32>
    %18 = vector.shape_cast %15 : vector<256x128xf32> to vector<1x1x256x128xf32>
    tpu.vector_store %arg6[%c0_12, %c0_13, %c0_14, %c0_15], %18 {strides = array<i32>} : memref<1x1x256x128xf32, #tpu.memory_space<vmem>>, vector<1x1x256x128xf32>,
    return
  }
  func.func @transform_0(%arg0: i32, %arg1: i32, %arg2: i32) -> (i32, i32, i32, i32) {
    %c0_i32 = arith.constant 0 : i32
    %c0_i32_0 = arith.constant 0 : i32
    return %arg0, %arg1, %arg2, %c0_i32 : i32, i32, i32, i32
  }
  func.func @transform_1(%arg0: i32, %arg1: i32, %arg2: i32) -> (i32, i32, i32, i32) {
    %c0_i32 = arith.constant 0 : i32
    %c0_i32_0 = arith.constant 0 : i32
    %c0_i32_1 = arith.constant 0 : i32
    %c0_i32_2 = arith.constant 0 : i32
    return %arg0, %c0_i32, %c0_i32_0, %c0_i32_1 : i32, i32, i32, i32
  }
  func.func @transform_2(%arg0: i32, %arg1: i32, %arg2: i32) -> (i32, i32, i32, i32) {
    %c0_i32 = arith.constant 0 : i32
    %c0_i32_0 = arith.constant 0 : i32
    %c0_i32_1 = arith.constant 0 : i32
    %c0_i32_2 = arith.constant 0 : i32
    return %arg0, %c0_i32, %c0_i32_0, %c0_i32_1 : i32, i32, i32, i32
  }
  func.func @transform_3(%arg0: i32, %arg1: i32, %arg2: i32) -> (i32, i32, i32, i32) {
    %c0_i32 = arith.constant 0 : i32
    %c0_i32_0 = arith.constant 0 : i32
    return %arg0, %arg1, %arg2, %c0_i32 : i32, i32, i32, i32
  }
}

</mosaic_0001>

<llo_original>
// kernel: conv_norm_act_pallas.2
$region0: #{conv_norm_act_pallas.2}
  #allocation0 [shape = 'u32[]', space=smem, size = 0x4, offset = 0x4, fixed_abs, tag = 'smem constant byte address 0x4 - core index']
  #allocation1 [shape = 'u32[144,128]{1,0:T(1,128)}', space=vmem, size = 0x12000, scoped, tag = 'internal scratch']
  %s0 = inlined_call_operand.vmem [shape: bf16[2,18,256,36], index: 0, kind: input, shape index: {}, may-alias: {0,1,2}]
  %s1 = inlined_call_operand.vmem [shape: bf16[2,18,256,36], index: 1, kind: input, shape index: {}, may-alias: {0,1,2}]
  %s2 = inlined_call_operand.vmem [shape: bf16[2,18,256,36], index: 2, kind: input, shape index: {}, may-alias: {0,1,2}]
  %s3 = inlined_call_operand.vmem [shape: bf16[3,36,128], index: 3, kind: input, shape index: {}]
  %s4 = inlined_call_operand.vmem [shape: bf16[2,16,256,128], index: 4, kind: output, shape index: {0}]
  %s5 = inlined_call_operand.vmem [shape: f32[2,16,1,8,128], index: 5, kind: output, shape index: {1}]
  %6 = xla_tuple %s4, %s5
  %s7 = sld [smem:[#allocation0]]
  $region57: #{conv_norm_act_pallas.2} parent=0
    _
  %s9 = ssub.s32 1, %s7
  %s10 = scalar_select 0, %s9, %s7
  loop: start=0, step=1, limit=34
  $region2: #{conv_norm_act_pallas.2} parent=0 // loop_pre_header
    _
  $region3: #{conv_norm_act_pallas.2} parent=0 // loop_header
    %s12 = sphi 0, %s16
    %p13 = scmp.ge.s32.totalorder %s12, 34
    %s19 = sphi 0, %s38
    %s20 = sphi 0, %s34
    %s21 = sphi 0, %s30
    %s22 = sphi 0, %s19
    %s23 = sphi 0, %s20
    %s24 = sphi 0, %s21
    %s25 = sphi 0, %s22
    %s26 = sphi 0, %s23
    %s27 = sphi 0, %s24
    %s45 = sphi 0, %s47
    %s48 = sphi 0, %s45
    %s49 = sphi 0, %s48
    %s65 = sphi 0, %s49
    %s77 = sphi 0, %s79
    %s80 = sphi 0, %s77
    %s81 = sphi 0, %s80
    %s97 = sphi 0, %s81
    %s109 = sphi 0, %s111
    %s112 = sphi 0, %s109
    %s113 = sphi 0, %s112
    %s129 = sphi 0, %s113
    %s133 = sphi 0, %s133
    %s135 = sphi 0, %s133
    %s136 = sphi 0, %s135
    %s150 = sphi 0, %s136
    %s160 = sphi 0, %s162
    %s163 = sphi 0, %s160
    %s164 = sphi 0, %s163
    %s180 = sphi 0, %s164
    %s190 = sphi 0, %s192
    %s193 = sphi 0, %s190
    %s194 = sphi 0, %s193
    %s210 = sphi 0, %s194
  $region4: #{conv_norm_act_pallas.2} parent=0 // loop_header_branch
    %15 = sbr.rel (%p13) target = $region8
  $region5: #{conv_norm_act_pallas.2} parent=0 // loop_body
    %s17 = ssub.s32 %s12, 1
    %s18 = ssub.s32 %s12, 2
    %s28 = sadd.s32 1, %s21
    %p29 = scmp.ge.s32.totalorder %s28, 1
    %s30 = scalar_select %p29, 0, %s28
    %s31 = sadd.s32 1, %s20
    %s32 = scalar_select %p29, %s31, %s20
    %p33 = scmp.ge.s32.totalorder %s32, 16
    %s34 = scalar_select %p33, 0, %s32
    %s35 = sadd.s32 1, %s19
    %s36 = scalar_select %p33, %s35, %s19
    %p37 = scmp.ge.s32.totalorder %s36, 2
    %s38 = scalar_select %p37, 0, %s36
    %s39 = ssub.s32 %s19, %s38
    %s40 = ssub.s32 %s20, %s34
    %s41 = sor.u32 %s39, %s40
    %s42 = ssub.s32 %s21, %s30
    %s43 = sor.u32 %s41, %s42
    %p44 = scmp.eq.s32.totalorder %s43, 0
    %s46 = sadd.s32 %s45, 1
    %s47 = scalar_select %p44, %s45, %s46
    %p50 = pneg %p44
    %p51 = scmp.eq.s32.totalorder %s12, 31
    %p52 = por %p50, %p51
    %p53 = scmp.ne.s32.totalorder %s45, %s48
    %p54 = scmp.eq.s32.totalorder %s12, 0
    %p55 = por %p53, %p54
    %p56 = scmp.ne.s32.totalorder %s45, %s48
    %p57 = scmp.eq.s32.totalorder %s17, 31
    %p58 = por %p56, %p57
    %p59 = scmp.ne.s32.totalorder %s48, %s49
    %p60 = scmp.eq.s32.totalorder %s17, 0
    %p61 = por %p59, %p60
    %p62 = scmp.ne.s32.totalorder %s48, %s49
    %p63 = scmp.eq.s32.totalorder %s18, 31
    %p64 = por %p62, %p63
    %p66 = scmp.ne.s32.totalorder %s49, %s65
    %p67 = scmp.eq.s32.totalorder %s18, 0
    %p68 = por %p66, %p67
    %s69 = sadd.s32 %s20, 1
    %s70 = sadd.s32 %s34, 1
    %s71 = ssub.s32 %s19, %s38
    %s72 = ssub.s32 %s69, %s70
    %s73 = sor.u32 %s71, %s72
    %s74 = ssub.s32 %s21, %s30
    %s75 = sor.u32 %s73, %s74
    %p76 = scmp.eq.s32.totalorder %s75, 0
    %s78 = sadd.s32 %s77, 1
    %s79 = scalar_select %p76, %s77, %s78
    %p82 = pneg %p76
    %p83 = scmp.eq.s32.totalorder %s12, 31
    %p84 = por %p82, %p83
    %p85 = scmp.ne.s32.totalorder %s77, %s80
    %p86 = scmp.eq.s32.totalorder %s12, 0
    %p87 = por %p85, %p86
    %p88 = scmp.ne.s32.totalorder %s77, %s80
    %p89 = scmp.eq.s32.totalorder %s17, 31
    %p90 = por %p88, %p89
    %p91 = scmp.ne.s32.totalorder %s80, %s81
    %p92 = scmp.eq.s32.totalorder %s17, 0
    %p93 = por %p91, %p92
    %p94 = scmp.ne.s32.totalorder %s80, %s81
    %p95 = scmp.eq.s32.totalorder %s18, 31
    %p96 = por %p94, %p95
    %p98 = scmp.ne.s32.totalorder %s81, %s97
    %p99 = scmp.eq.s32.totalorder %s18, 0
    %p100 = por %p98, %p99
    %s101 = sadd.s32 %s20, 2
    %s102 = sadd.s32 %s34, 2
    %s103 = ssub.s32 %s19, %s38
    %s104 = ssub.s32 %s101, %s102
    %s105 = sor.u32 %s103, %s104
    %s106 = ssub.s32 %s21, %s30
    %s107 = sor.u32 %s105, %s106
    %p108 = scmp.eq.s32.totalorder %s107, 0
    %s110 = sadd.s32 %s109, 1
    %s111 = scalar_select %p108, %s109, %s110
    %p114 = pneg %p108
    %p115 = scmp.eq.s32.totalorder %s12, 31
    %p116 = por %p114, %p115
    %p117 = scmp.ne.s32.totalorder %s109, %s112
    %p118 = scmp.eq.s32.totalorder %s12, 0
    %p119 = por %p117, %p118
    %p120 = scmp.ne.s32.totalorder %s109, %s112
    %p121 = scmp.eq.s32.totalorder %s17, 31
    %p122 = por %p120, %p121
    %p123 = scmp.ne.s32.totalorder %s112, %s113
    %p124 = scmp.eq.s32.totalorder %s17, 0
    %p125 = por %p123, %p124
    %p126 = scmp.ne.s32.totalorder %s112, %s113
    %p127 = scmp.eq.s32.totalorder %s18, 31
    %p128 = por %p126, %p127
    %p130 = scmp.ne.s32.totalorder %s113, %s129
    %p131 = scmp.eq.s32.totalorder %s18, 0
    %p132 = por %p130, %p131
    %s134 = sadd.s32 %s133, 1
    %p137 = scmp.eq.s32.totalorder %s12, 31
    %p138 = scmp.ne.s32.totalorder %s133, %s135
    %p139 = scmp.eq.s32.totalorder %s12, 0
    %p140 = por %p138, %p139
    %p141 = scmp.ne.s32.totalorder %s133, %s135
    %p142 = scmp.eq.s32.totalorder %s17, 31
    %p143 = por %p141, %p142
    %p144 = scmp.ne.s32.totalorder %s135, %s136
    %p145 = scmp.eq.s32.totalorder %s17, 0
    %p146 = por %p144, %p145
    %p147 = scmp.ne.s32.totalorder %s135, %s136
    %p148 = scmp.eq.s32.totalorder %s18, 31
    %p149 = por %p147, %p148
    %p151 = scmp.ne.s32.totalorder %s136, %s150
    %p152 = scmp.eq.s32.totalorder %s18, 0
    %p153 = por %p151, %p152
    %s154 = ssub.s32 %s19, %s38
    %s155 = ssub.s32 %s20, %s34
    %s156 = sor.u32 %s154, %s155
    %s157 = ssub.s32 %s21, %s30
    %s158 = sor.u32 %s156, %s157
    %p159 = scmp.eq.s32.totalorder %s158, 0
    %s161 = sadd.s32 %s160, 1
    %s162 = scalar_select %p159, %s160, %s161
    %p165 = pneg %p159
    %p166 = scmp.eq.s32.totalorder %s12, 31
    %p167 = por %p165, %p166
    %p168 = scmp.ne.s32.totalorder %s160, %s163
    %p169 = scmp.eq.s32.totalorder %s12, 0
    %p170 = por %p168, %p169
    %p171 = scmp.ne.s32.totalorder %s160, %s163
    %p172 = scmp.eq.s32.totalorder %s17, 31
    %p173 = por %p171, %p172
    %p174 = scmp.ne.s32.totalorder %s163, %s164
    %p175 = scmp.eq.s32.totalorder %s17, 0
    %p176 = por %p174, %p175
    %p177 = scmp.ne.s32.totalorder %s163, %s164
    %p178 = scmp.eq.s32.totalorder %s18, 31
    %p179 = por %p177, %p178
    %p181 = scmp.ne.s32.totalorder %s164, %s180
    %p182 = scmp.eq.s32.totalorder %s18, 0
    %p183 = por %p181, %p182
    %s184 = ssub.s32 %s19, %s38
    %s185 = ssub.s32 %s20, %s34
    %s186 = sor.u32 %s184, %s185
    %s187 = ssub.s32 %s21, %s30
    %s188 = sor.u32 %s186, %s187
    %p189 = scmp.eq.s32.totalorder %s188, 0
    %s191 = sadd.s32 %s190, 1
    %s192 = scalar_select %p189, %s190, %s191
    %p195 = pneg %p189
    %p196 = scmp.eq.s32.totalorder %s12, 31
    %p197 = por %p195, %p196
    %p198 = scmp.ne.s32.totalorder %s190, %s193
    %p199 = scmp.eq.s32.totalorder %s12, 0
    %p200 = por %p198, %p199
    %p201 = scmp.ne.s32.totalorder %s190, %s193
    %p202 = scmp.eq.s32.totalorder %s17, 31
    %p203 = por %p201, %p202
    %p204 = scmp.ne.s32.totalorder %s193, %s194
    %p205 = scmp.eq.s32.totalorder %s17, 0
    %p206 = por %p204, %p205
    %p207 = scmp.ne.s32.totalorder %s193, %s194
    %p208 = scmp.eq.s32.totalorder %s18, 31
    %p209 = por %p207, %p208
    %p211 = scmp.ne.s32.totalorder %s194, %s210
    %p212 = scmp.eq.s32.totalorder %s18, 0
    %p213 = por %p211, %p212
    %p214 = scmp.le.s32.totalorder 1, %s12
    %p215 = scmp.lt.s32.totalorder %s12, 33
    %p216 = pnand %p214, %p215
    %p217 = pneg %p216
    // Predicated region
    $region9: #{conv_norm_act_pallas.2} parent=5 // pred_check
      _
    $region10: #{conv_norm_act_pallas.2} parent=5 // pred_check_branch
      %219 = sbr.rel (%p216) target = $region12
    $region11: #{conv_norm_act_pallas.2} parent=5 // pred_region
      %s220 = ssub.s32 %s12, 1
      // Predicated region
      $region13: #{conv_norm_act_pallas.2} parent=11 // pred_check
        %p221 = pneg %p146
      $region14: #{conv_norm_act_pallas.2} parent=11 // pred_check_branch
        %223 = sbr.rel (%p221) target = $region16
      $region15: #{conv_norm_act_pallas.2} parent=11 // pred_region
        _
      $region16: #{conv_norm_act_pallas.2} parent=11 // pred_fallthru
        _
    $region12: #{conv_norm_act_pallas.2} parent=5 // pred_fallthru
      _
    %p224 = scmp.lt.s32.totalorder %s12, 32
    // Predicated region
    $region17: #{conv_norm_act_pallas.2} parent=5 // pred_check
      %p225 = pneg %p224
    $region18: #{conv_norm_act_pallas.2} parent=5 // pred_check_branch
      %227 = sbr.rel (%p225) target = $region20
    $region19: #{conv_norm_act_pallas.2} parent=5 // pred_region
      // Predicated region
      $region21: #{conv_norm_act_pallas.2} parent=19 // pred_check
        %p228 = pneg %p55
      $region22: #{conv_norm_act_pallas.2} parent=19 // pred_check_branch
        %230 = sbr.rel (%p228) target = $region24
      $region23: #{conv_norm_act_pallas.2} parent=19 // pred_region
        %s231 = smul.u32 32, %s21
        %p232 = scmp.lt.s32.totalorder %s19, 1
        %s233 = scalar_select %p232, %s19, 1
        %p234 = scmp.lt.s32.totalorder %s20, 17
        %s235 = scalar_select %p234, %s20, 17
        %p236 = scmp.lt.s32.totalorder %s231, 31
        %s237 = scalar_select %p236, %s231, 31
        %s238 = smul.addr %s235, 32
        %s239 = sadd.s32 %s237, %s238
        %s240 = smul.addr %s233, 576
        %s241 = sadd.s32 %s239, %s240
        %s242 = smul.addr %s241, 4
        %s243 = scalar_lea.vmem %s0, %s242
        %s244 = smul.u32 32, %s21
      $region24: #{conv_norm_act_pallas.2} parent=19 // pred_fallthru
        _
      // Predicated region
      $region25: #{conv_norm_act_pallas.2} parent=19 // pred_check
        %p245 = pneg %p87
      $region26: #{conv_norm_act_pallas.2} parent=19 // pred_check_branch
        %247 = sbr.rel (%p245) target = $region28
      $region27: #{conv_norm_act_pallas.2} parent=19 // pred_region
        %s248 = sadd.s32 %s20, 1
        %s249 = smul.u32 32, %s21
        %p250 = scmp.lt.s32.totalorder %s19, 1
        %s251 = scalar_select %p250, %s19, 1
        %p252 = scmp.lt.s32.totalorder %s248, 17
        %s253 = scalar_select %p252, %s248, 17
        %p254 = scmp.lt.s32.totalorder %s249, 31
        %s255 = scalar_select %p254, %s249, 31
        %s256 = smul.addr %s253, 32
        %s257 = sadd.s32 %s255, %s256
        %s258 = smul.addr %s251, 576
        %s259 = sadd.s32 %s257, %s258
        %s260 = smul.addr %s259, 4
        %s261 = scalar_lea.vmem %s1, %s260
        %s262 = sadd.s32 %s20, 1
        %s263 = smul.u32 32, %s21
      $region28: #{conv_norm_act_pallas.2} parent=19 // pred_fallthru
        _
      // Predicated region
      $region29: #{conv_norm_act_pallas.2} parent=19 // pred_check
        %p264 = pneg %p119
      $region30: #{conv_norm_act_pallas.2} parent=19 // pred_check_branch
        %266 = sbr.rel (%p264) target = $region32
      $region31: #{conv_norm_act_pallas.2} parent=19 // pred_region
        %s267 = sadd.s32 %s20, 2
        %s268 = smul.u32 32, %s21
        %p269 = scmp.lt.s32.totalorder %s19, 1
        %s270 = scalar_select %p269, %s19, 1
        %p271 = scmp.lt.s32.totalorder %s267, 17
        %s272 = scalar_select %p271, %s267, 17
        %p273 = scmp.lt.s32.totalorder %s268, 31
        %s274 = scalar_select %p273, %s268, 31
        %s275 = smul.addr %s272, 32
        %s276 = sadd.s32 %s274, %s275
        %s277 = smul.addr %s270, 576
        %s278 = sadd.s32 %s276, %s277
        %s279 = smul.addr %s278, 4
        %s280 = scalar_lea.vmem %s2, %s279
        %s281 = sadd.s32 %s20, 2
        %s282 = smul.u32 32, %s21
      $region32: #{conv_norm_act_pallas.2} parent=19 // pred_fallthru
        _
    $region20: #{conv_norm_act_pallas.2} parent=5 // pred_fallthru
      _
    %p283 = scmp.le.s32.totalorder 1, %s12
    %p284 = scmp.lt.s32.totalorder %s12, 33
    %p285 = pnand %p283, %p284
    %p286 = pneg %p285
    // Predicated region
    $region33: #{conv_norm_act_pallas.2} parent=5 // pred_check
      _
    $region34: #{conv_norm_act_pallas.2} parent=5 // pred_check_branch
      %288 = sbr.rel (%p285) target = $region36
    $region35: #{conv_norm_act_pallas.2} parent=5 // pred_region
      %s289 = ssub.s32 %s12, 1
      %s290 = smul.u32 32, %s24
      %p291 = scmp.lt.s32.totalorder %s22, 1
      %s292 = scalar_select %p291, %s22, 1
      %p293 = scmp.lt.s32.totalorder %s23, 17
      %s294 = scalar_select %p293, %s23, 17
      %p295 = scmp.lt.s32.totalorder %s290, 31
      %s296 = scalar_select %p295, %s290, 31
      %s297 = smul.addr %s294, 32
      %s298 = sadd.s32 %s296, %s297
      %s299 = smul.addr %s292, 576
      %s300 = sadd.s32 %s298, %s299
      %s301 = smul.addr %s300, 4
      %s302 = scalar_lea.vmem %s0, %s301
      %p303 = pneg %p61
      %p304 = pneg %p58
      %s305 = sadd.s32 %s23, 1
      %s306 = smul.u32 32, %s24
      %p307 = scmp.lt.s32.totalorder %s22, 1
      %s308 = scalar_select %p307, %s22, 1
      %p309 = scmp.lt.s32.totalorder %s305, 17
      %s310 = scalar_select %p309, %s305, 17
      %p311 = scmp.lt.s32.totalorder %s306, 31
      %s312 = scalar_select %p311, %s306, 31
      %s313 = smul.addr %s310, 32
      %s314 = sadd.s32 %s312, %s313
      %s315 = smul.addr %s308, 576
      %s316 = sadd.s32 %s314, %s315
      %s317 = smul.addr %s316, 4
      %s318 = scalar_lea.vmem %s1, %s317
      %p319 = pneg %p93
      %p320 = pneg %p90
      %s321 = sadd.s32 %s23, 2
      %s322 = smul.u32 32, %s24
      %p323 = scmp.lt.s32.totalorder %s22, 1
      %s324 = scalar_select %p323, %s22, 1
      %p325 = scmp.lt.s32.totalorder %s321, 17
      %s326 = scalar_select %p325, %s321, 17
      %p327 = scmp.lt.s32.totalorder %s322, 31
      %s328 = scalar_select %p327, %s322, 31
      %s329 = smul.addr %s326, 32
      %s330 = sadd.s32 %s328, %s329
      %s331 = smul.addr %s324, 576
      %s332 = sadd.s32 %s330, %s331
      %s333 = smul.addr %s332, 4
      %s334 = scalar_lea.vmem %s2, %s333
      %p335 = pneg %p125
      %p336 = pneg %p122
      %p337 = pneg %p146
      %p338 = pneg %p143
      %p339 = pneg %p176
      %p340 = pneg %p173
      %s341 = smul.u32 32, %s24
      %p342 = scmp.lt.s32.totalorder %s22, 1
      %s343 = scalar_select %p342, %s22, 1
      %p344 = scmp.lt.s32.totalorder %s23, 15
      %s345 = scalar_select %p344, %s23, 15
      %p346 = scmp.lt.s32.totalorder %s341, 31
      %s347 = scalar_select %p346, %s341, 31
      %s348 = smul.addr %s345, 32
      %s349 = sadd.s32 %s347, %s348
      %s350 = smul.addr %s343, 512
      %s351 = sadd.s32 %s349, %s350
      %s352 = smul.addr %s351, 4
      %s353 = scalar_lea.vmem %s4, %s352
      %p354 = pneg %p206
      %p355 = pneg %p203
      %p356 = scmp.lt.s32.totalorder %s22, 1
      %s357 = scalar_select %p356, %s22, 1
      %p358 = scmp.lt.s32.totalorder %s23, 15
      %s359 = scalar_select %p358, %s23, 15
      %p360 = scmp.lt.s32.totalorder %s24, 0
      %s361 = scalar_select %p360, %s24, 0
      %s362 = sadd.s32 %s361, %s359
      %s363 = smul.addr %s357, 16
      %s364 = sadd.s32 %s362, %s363
      %s365 = smul.addr %s364, 8
      %s366 = scalar_lea.vmem %s5, %s365
      %s367 = smul.u32 32, %s24
      %p368 = scmp.lt.s32.totalorder %s22, 1
      %s369 = scalar_select %p368, %s22, 1
      %p370 = scmp.lt.s32.totalorder %s23, 17
      %s371 = scalar_select %p370, %s23, 17
      %p372 = scmp.lt.s32.totalorder %s367, 31
      %s373 = scalar_select %p372, %s367, 31
      %s374 = smul.addr %s371, 32
      %s375 = sadd.s32 %s373, %s374
      %s376 = smul.addr %s369, 576
      %s377 = sadd.s32 %s375, %s376
      %s378 = smul.addr %s377, 4
      %s379 = scalar_lea.vmem %s0, %s378
      %s380 = smul.u32 32, %s24
      %s381 = sadd.s32 %s23, 1
      %s382 = smul.u32 32, %s24
      %p383 = scmp.lt.s32.totalorder %s22, 1
      %s384 = scalar_select %p383, %s22, 1
      %p385 = scmp.lt.s32.totalorder %s381, 17
      %s386 = scalar_select %p385, %s381, 17
      %p387 = scmp.lt.s32.totalorder %s382, 31
      %s388 = scalar_select %p387, %s382, 31
      %s389 = smul.addr %s386, 32
      %s390 = sadd.s32 %s388, %s389
      %s391 = smul.addr %s384, 576
      %s392 = sadd.s32 %s390, %s391
      %s393 = smul.addr %s392, 4
      %s394 = scalar_lea.vmem %s1, %s393
      %s395 = sadd.s32 %s23, 1
      %s396 = smul.u32 32, %s24
      %s397 = sadd.s32 %s23, 2
      %s398 = smul.u32 32, %s24
      %p399 = scmp.lt.s32.totalorder %s22, 1
      %s400 = scalar_select %p399, %s22, 1
      %p401 = scmp.lt.s32.totalorder %s397, 17
      %s402 = scalar_select %p401, %s397, 17
      %p403 = scmp.lt.s32.totalorder %s398, 31
      %s404 = scalar_select %p403, %s398, 31
      %s405 = smul.addr %s402, 32
      %s406 = sadd.s32 %s404, %s405
      %s407 = smul.addr %s400, 576
      %s408 = sadd.s32 %s406, %s407
      %s409 = smul.addr %s408, 4
      %s410 = scalar_lea.vmem %s2, %s409
      %s411 = sadd.s32 %s23, 2
      %s412 = smul.u32 32, %s24
      %s413 = smul.u32 32, %s24
      %p414 = scmp.lt.s32.totalorder %s22, 1
      %s415 = scalar_select %p414, %s22, 1
      %p416 = scmp.lt.s32.totalorder %s23, 15
      %s417 = scalar_select %p416, %s23, 15
      %p418 = scmp.lt.s32.totalorder %s413, 31
      %s419 = scalar_select %p418, %s413, 31
      %s420 = smul.addr %s417, 32
      %s421 = sadd.s32 %s419, %s420
      %s422 = smul.addr %s415, 512
      %s423 = sadd.s32 %s421, %s422
      %s424 = smul.addr %s423, 4
      %s425 = scalar_lea.vmem %s4, %s424
      %s426 = smul.u32 32, %s24
      %p427 = scmp.lt.s32.totalorder %s22, 1
      %s428 = scalar_select %p427, %s22, 1
      %p429 = scmp.lt.s32.totalorder %s23, 15
      %s430 = scalar_select %p429, %s23, 15
      %p431 = scmp.lt.s32.totalorder %s24, 0
      %s432 = scalar_select %p431, %s24, 0
      %s433 = sadd.s32 %s432, %s430
      %s434 = smul.addr %s428, 16
      %s435 = sadd.s32 %s433, %s434
      %s436 = smul.addr %s435, 8
      %s437 = scalar_lea.vmem %s5, %s436
      %v439 = vld [vmem:[%s379] sm:$0xf]
      %v440 = vld [vmem:[%s379 + $0x4] sm:$0xf]
      %v441 = vld [vmem:[%s379 + $0x8] sm:$0xf]
      %v442 = vld [vmem:[%s379 + $0xc] sm:$0xf]
      %v443 = vld [vmem:[%s379 + $0x10] sm:$0xf]
      %v444 = vld [vmem:[%s379 + $0x14] sm:$0xf]
      %v445 = vld [vmem:[%s379 + $0x18] sm:$0xf]
      %v446 = vld [vmem:[%s379 + $0x1c] sm:$0xf]
      %v447 = vld [vmem:[%s379 + $0x20] sm:$0xf]
      %v448 = vld [vmem:[%s379 + $0x24] sm:$0xf]
      %v449 = vld [vmem:[%s379 + $0x28] sm:$0xf]
      %v450 = vld [vmem:[%s379 + $0x2c] sm:$0xf]
      %v451 = vld [vmem:[%s379 + $0x30] sm:$0xf]
      %v452 = vld [vmem:[%s379 + $0x34] sm:$0xf]
      %v453 = vld [vmem:[%s379 + $0x38] sm:$0xf]
      %v454 = vld [vmem:[%s379 + $0x3c] sm:$0xf]
      %v455 = vld [vmem:[%s379 + $0x40] sm:$0xf]
      %v456 = vld [vmem:[%s379 + $0x44] sm:$0xf]
      %v457 = vld [vmem:[%s379 + $0x48] sm:$0xf]
      %v458 = vld [vmem:[%s379 + $0x4c] sm:$0xf]
      %v459 = vld [vmem:[%s379 + $0x50] sm:$0xf]
      %v460 = vld [vmem:[%s379 + $0x54] sm:$0xf]
      %v461 = vld [vmem:[%s379 + $0x58] sm:$0xf]
      %v462 = vld [vmem:[%s379 + $0x5c] sm:$0xf]
      %v463 = vld [vmem:[%s379 + $0x60] sm:$0xf]
      %v464 = vld [vmem:[%s379 + $0x64] sm:$0xf]
      %v465 = vld [vmem:[%s379 + $0x68] sm:$0xf]
      %v466 = vld [vmem:[%s379 + $0x6c] sm:$0xf]
      %v467 = vld [vmem:[%s379 + $0x70] sm:$0xf]
      %v468 = vld [vmem:[%s379 + $0x74] sm:$0xf]
      %v469 = vld [vmem:[%s379 + $0x78] sm:$0xf]
      %v470 = vld [vmem:[%s379 + $0x7c] sm:$0xf]
      %v471 = vld [vmem:[%s3] sm:$0xf]
      %v472 = vld [vmem:[%s3 + $0x4] sm:$0xf]
      %v473 = vld [vmem:[%s3 + $0x8] sm:$0xf]
      %v474 = vld [vmem:[%s3 + $0xc] sm:$0xf]
      %v475 = vld [vmem:[%s3 + $0x10] sm:$0x3]
      %v476 = vld [vmem:[%s394] sm:$0xf]
      %v477 = vld [vmem:[%s394 + $0x4] sm:$0xf]
      %v478 = vld [vmem:[%s394 + $0x8] sm:$0xf]
      %v479 = vld [vmem:[%s394 + $0xc] sm:$0xf]
      %v480 = vld [vmem:[%s394 + $0x10] sm:$0xf]
      %v481 = vld [vmem:[%s394 + $0x14] sm:$0xf]
      %v482 = vld [vmem:[%s394 + $0x18] sm:$0xf]
      %v483 = vld [vmem:[%s394 + $0x1c] sm:$0xf]
      %v484 = vld [vmem:[%s394 + $0x20] sm:$0xf]
      %v485 = vld [vmem:[%s394 + $0x24] sm:$0xf]
      %v486 = vld [vmem:[%s394 + $0x28] sm:$0xf]
      %v487 = vld [vmem:[%s394 + $0x2c] sm:$0xf]
      %v488 = vld [vmem:[%s394 + $0x30] sm:$0xf]
      %v489 = vld [vmem:[%s394 + $0x34] sm:$0xf]
      %v490 = vld [vmem:[%s394 + $0x38] sm:$0xf]
      %v491 = vld [vmem:[%s394 + $0x3c] sm:$0xf]
      %v492 = vld [vmem:[%s394 + $0x40] sm:$0xf]
      %v493 = vld [vmem:[%s394 + $0x44] sm:$0xf]
      %v494 = vld [vmem:[%s394 + $0x48] sm:$0xf]
      %v495 = vld [vmem:[%s394 + $0x4c] sm:$0xf]
      %v496 = vld [vmem:[%s394 + $0x50] sm:$0xf]
      %v497 = vld [vmem:[%s394 + $0x54] sm:$0xf]
      %v498 = vld [vmem:[%s394 + $0x58] sm:$0xf]
      %v499 = vld [vmem:[%s394 + $0x5c] sm:$0xf]
      %v500 = vld [vmem:[%s394 + $0x60] sm:$0xf]
      %v501 = vld [vmem:[%s394 + $0x64] sm:$0xf]
      %v502 = vld [vmem:[%s394 + $0x68] sm:$0xf]
      %v503 = vld [vmem:[%s394 + $0x6c] sm:$0xf]
      %v504 = vld [vmem:[%s394 + $0x70] sm:$0xf]
      %v505 = vld [vmem:[%s394 + $0x74] sm:$0xf]
      %v506 = vld [vmem:[%s394 + $0x78] sm:$0xf]
      %v507 = vld [vmem:[%s394 + $0x7c] sm:$0xf]
      %s508 = scalar_lea.vmem %s3, 20
      %v509 = vld [vmem:[%s508] sm:$0xf]
      %v510 = vld [vmem:[%s508 + $0x4] sm:$0xf]
      %v511 = vld [vmem:[%s508 + $0x8] sm:$0xf]
      %v512 = vld [vmem:[%s508 + $0xc] sm:$0xf]
      %v513 = vld [vmem:[%s508 + $0x10] sm:$0x3]
      %v546 = vunpack.c.l.b16 %v476
      %v547 = vunpack.c.l.b16 %v477
      %v548 = vunpack.c.l.b16 %v478
      %v549 = vunpack.c.l.b16 %v479
      %v550 = vunpack.c.l.b16 %v480
      %v551 = vunpack.c.l.b16 %v481
      %v552 = vunpack.c.l.b16 %v482
      %v553 = vunpack.c.l.b16 %v483
      %v554 = vunpack.c.l.b16 %v484
      %v555 = vunpack.c.l.b16 %v485
      %v556 = vunpack.c.l.b16 %v486
      %v557 = vunpack.c.l.b16 %v487
      %v558 = vunpack.c.l.b16 %v488
      %v559 = vunpack.c.l.b16 %v489
      %v560 = vunpack.c.l.b16 %v490
      %v561 = vunpack.c.l.b16 %v491
      %v562 = vunpack.c.l.b16 %v492
      %v563 = vunpack.c.l.b16 %v493
      %v564 = vunpack.c.l.b16 %v494
      %v565 = vunpack.c.l.b16 %v495
      %v566 = vunpack.c.l.b16 %v496
      %v567 = vunpack.c.l.b16 %v497
      %v568 = vunpack.c.l.b16 %v498
      %v569 = vunpack.c.l.b16 %v499
      %v570 = vunpack.c.l.b16 %v500
      %v571 = vunpack.c.l.b16 %v501
      %v572 = vunpack.c.l.b16 %v502
      %v573 = vunpack.c.l.b16 %v503
      %v574 = vunpack.c.l.b16 %v504
      %v575 = vunpack.c.l.b16 %v505
      %v576 = vunpack.c.l.b16 %v506
      %v577 = vunpack.c.l.b16 %v507
      %v578 = vpack.c.b16 %v547, %v546
      %v579 = vpack.c.b16 %v549, %v548
      %v580 = vpack.c.b16 %v551, %v550
      %v581 = vpack.c.b16 %v553, %v552
      %v582 = vpack.c.b16 %v555, %v554
      %v583 = vpack.c.b16 %v557, %v556
      %v584 = vpack.c.b16 %v559, %v558
      %v585 = vpack.c.b16 %v561, %v560
      %v586 = vpack.c.b16 %v563, %v562
      %v587 = vpack.c.b16 %v565, %v564
      %v588 = vpack.c.b16 %v567, %v566
      %v589 = vpack.c.b16 %v569, %v568
      %v590 = vpack.c.b16 %v571, %v570
      %v591 = vpack.c.b16 %v573, %v572
      %v592 = vpack.c.b16 %v575, %v574
      %v593 = vpack.c.b16 %v577, %v576
      %v599 = vunpack.c.l.b16 %v509
      %v600 = vunpack.c.l.b16 %v510
      %v601 = vunpack.c.l.b16 %v511
      %v602 = vunpack.c.l.b16 %v512
      %v603 = vunpack.c.l.b16 %v513
      %v604 = vpack.c.b16 %v600, %v599
      %v605 = vpack.c.b16 %v602, %v601
      %v606 = vpack.c.b16 %v603, %v603
      %vm609 = vcmask 293888
      %v611 = vsel %vm609, %v578, 0
      %v614 = vsel %vm609, %v579, 0
      %v617 = vsel %vm609, %v580, 0
      %v620 = vsel %vm609, %v581, 0
      %v623 = vsel %vm609, %v582, 0
      %v626 = vsel %vm609, %v583, 0
      %v629 = vsel %vm609, %v584, 0
      %v632 = vsel %vm609, %v585, 0
      %v635 = vsel %vm609, %v586, 0
      %v638 = vsel %vm609, %v587, 0
      %v641 = vsel %vm609, %v588, 0
      %v644 = vsel %vm609, %v589, 0
      %v647 = vsel %vm609, %v590, 0
      %v650 = vsel %vm609, %v591, 0
      %v653 = vsel %vm609, %v592, 0
      %v656 = vsel %vm609, %v593, 0
      %vm658 = vcmask 1041408
      %v660 = vsel %vm658, %v606, 0
      %662 = vmatprep.subr.bf16.mxu0 0
      %663 = vmatpush1.bf16.msra.mxu0 0
      %664 = vmatprep.subr.bf16.mxu0 0
      %665 = vmatpush1.bf16.msra.mxu0 0
      %666 = vmatprep.subr.bf16.mxu0 0
      %667 = vmatpush1.bf16.msra.mxu0 0
      %668 = vmatprep.subr.bf16.mxu0 0
      %669 = vmatpush1.bf16.msra.mxu0 0
      %670 = vmatprep.subr.bf16.mxu0 0
      %671 = vmatpush1.bf16.msra.mxu0 0
      %672 = vmatprep.subr.bf16.mxu0 0
      %673 = vmatpush1.bf16.msra.mxu0 %v660
      %674 = vmatprep.subr.bf16.mxu0 0
      %675 = vmatpush1.bf16.msra.mxu0 %v605
      %676 = vmatprep.subr.bf16.mxu0 0
      %677 = vmatpush1.bf16.msra.mxu0 %v604
      %678 = vmatprep.subr.bf16.mxu0 0
      %679 = vmatpush2.bf16.msra.mxu0 0
      %680 = vmatprep.subr.bf16.mxu0 0
      %681 = vmatpush2.bf16.msra.mxu0 0
      %682 = vmatprep.subr.bf16.mxu0 0
      %683 = vmatpush2.bf16.msra.mxu0 0
      %684 = vmatprep.subr.bf16.mxu0 0
      %685 = vmatpush2.bf16.msra.mxu0 0
      %686 = vmatprep.subr.bf16.mxu0 0
      %687 = vmatpush2.bf16.msra.mxu0 0
      %688 = vmatprep.subr.bf16.mxu0 0
      %689 = vmatpush2.bf16.msra.mxu0 0
      %690 = vmatprep.subr.bf16.mxu0 0
      %691 = vmatpush2.bf16.msra.mxu0 0
      %692 = vmatprep.subr.bf16.mxu0 0
      %693 = vmatpush2.bf16.msra.mxu0 0
      %694 = vmatprep.mubr.bf16.mxu0 0
      %695 = vmatmul.mubr.bf16.gmra.mxu0 %v611
      %v696 = vpop.f32.mrf.mxu0
      %v697 = vadd.f32 0.0, %v696
      %v698 = vpop.f32.mrf.mxu0
      %v699 = vpop.f32.mrf.mxu0
      %v700 = vadd.f32 0.0, %v699
      %v701 = vpop.f32.mrf.mxu0
      %702 = vmatprep.mubr.bf16.mxu0 0
      %703 = vmatmul.mubr.bf16.gmra.mxu0 %v614
      %v704 = vpop.f32.mrf.mxu0
      %v705 = vadd.f32 0.0, %v704
      %v706 = vpop.f32.mrf.mxu0
      %v707 = vpop.f32.mrf.mxu0
      %v708 = vadd.f32 0.0, %v707
      %v709 = vpop.f32.mrf.mxu0
      %710 = vmatprep.mubr.bf16.mxu0 0
      %711 = vmatmul.mubr.bf16.gmra.mxu0 %v617
      %v712 = vpop.f32.mrf.mxu0
      %v713 = vadd.f32 0.0, %v712
      %v714 = vpop.f32.mrf.mxu0
      %v715 = vpop.f32.mrf.mxu0
      %v716 = vadd.f32 0.0, %v715
      %v717 = vpop.f32.mrf.mxu0
      %718 = vmatprep.mubr.bf16.mxu0 0
      %719 = vmatmul.mubr.bf16.gmra.mxu0 %v620
      %v720 = vpop.f32.mrf.mxu0
      %v721 = vadd.f32 0.0, %v720
      %v722 = vpop.f32.mrf.mxu0
      %v723 = vpop.f32.mrf.mxu0
      %v724 = vadd.f32 0.0, %v723
      %v725 = vpop.f32.mrf.mxu0
      %726 = vmatprep.mubr.bf16.mxu0 0
      %727 = vmatmul.mubr.bf16.gmra.mxu0 %v623
      %v728 = vpop.f32.mrf.mxu0
      %v729 = vadd.f32 0.0, %v728
      %v730 = vpop.f32.mrf.mxu0
      %v731 = vpop.f32.mrf.mxu0
      %v732 = vadd.f32 0.0, %v731
      %v733 = vpop.f32.mrf.mxu0
      %734 = vmatprep.mubr.bf16.mxu0 0
      %735 = vmatmul.mubr.bf16.gmra.mxu0 %v626
      %v736 = vpop.f32.mrf.mxu0
      %v737 = vadd.f32 0.0, %v736
      %v738 = vpop.f32.mrf.mxu0
      %v739 = vpop.f32.mrf.mxu0
      %v740 = vadd.f32 0.0, %v739
      %v741 = vpop.f32.mrf.mxu0
      %742 = vmatprep.mubr.bf16.mxu0 0
      %743 = vmatmul.mubr.bf16.gmra.mxu0 %v629
      %v744 = vpop.f32.mrf.mxu0
      %v745 = vadd.f32 0.0, %v744
      %v746 = vpop.f32.mrf.mxu0
      %v747 = vpop.f32.mrf.mxu0
      %v748 = vadd.f32 0.0, %v747
      %v749 = vpop.f32.mrf.mxu0
      %750 = vmatprep.mubr.bf16.mxu0 0
      %751 = vmatmul.mubr.bf16.gmra.mxu0 %v632
      %v752 = vpop.f32.mrf.mxu0
      %v753 = vadd.f32 0.0, %v752
      %v754 = vpop.f32.mrf.mxu0
      %v755 = vpop.f32.mrf.mxu0
      %v756 = vadd.f32 0.0, %v755
      %v757 = vpop.f32.mrf.mxu0
      %758 = vmatprep.mubr.bf16.mxu0 0
      %759 = vmatmul.mubr.bf16.gmra.mxu0 %v635
      %v760 = vpop.f32.mrf.mxu0
      %v761 = vadd.f32 0.0, %v760
      %v762 = vpop.f32.mrf.mxu0
      %v763 = vpop.f32.mrf.mxu0
      %v764 = vadd.f32 0.0, %v763
      %v765 = vpop.f32.mrf.mxu0
      %766 = vmatprep.mubr.bf16.mxu0 0
      %767 = vmatmul.mubr.bf16.gmra.mxu0 %v638
      %v768 = vpop.f32.mrf.mxu0
      %v769 = vadd.f32 0.0, %v768
      %v770 = vpop.f32.mrf.mxu0
      %v771 = vpop.f32.mrf.mxu0
      %v772 = vadd.f32 0.0, %v771
      %v773 = vpop.f32.mrf.mxu0
      %774 = vmatprep.mubr.bf16.mxu0 0
      %775 = vmatmul.mubr.bf16.gmra.mxu0 %v641
      %v776 = vpop.f32.mrf.mxu0
      %v777 = vadd.f32 0.0, %v776
      %v778 = vpop.f32.mrf.mxu0
      %v779 = vpop.f32.mrf.mxu0
      %v780 = vadd.f32 0.0, %v779
      %v781 = vpop.f32.mrf.mxu0
      %782 = vmatprep.mubr.bf16.mxu0 0
      %783 = vmatmul.mubr.bf16.gmra.mxu0 %v644
      %v784 = vpop.f32.mrf.mxu0
      %v785 = vadd.f32 0.0, %v784
      %v786 = vpop.f32.mrf.mxu0
      %v787 = vpop.f32.mrf.mxu0
      %v788 = vadd.f32 0.0, %v787
      %v789 = vpop.f32.mrf.mxu0
      %790 = vmatprep.mubr.bf16.mxu0 0
      %791 = vmatmul.mubr.bf16.gmra.mxu0 %v647
      %v792 = vpop.f32.mrf.mxu0
      %v793 = vadd.f32 0.0, %v792
      %v794 = vpop.f32.mrf.mxu0
      %v795 = vpop.f32.mrf.mxu0
      %v796 = vadd.f32 0.0, %v795
      %v797 = vpop.f32.mrf.mxu0
      %798 = vmatprep.mubr.bf16.mxu0 0
      %799 = vmatmul.mubr.bf16.gmra.mxu0 %v650
      %v800 = vpop.f32.mrf.mxu0
      %v801 = vadd.f32 0.0, %v800
      %v802 = vpop.f32.mrf.mxu0
      %v803 = vpop.f32.mrf.mxu0
      %v804 = vadd.f32 0.0, %v803
      %v805 = vpop.f32.mrf.mxu0
      %806 = vmatprep.mubr.bf16.mxu0 0
      %807 = vmatmul.mubr.bf16.gmra.mxu0 %v653
      %v808 = vpop.f32.mrf.mxu0
      %v809 = vadd.f32 0.0, %v808
      %v810 = vpop.f32.mrf.mxu0
      %v811 = vpop.f32.mrf.mxu0
      %v812 = vadd.f32 0.0, %v811
      %v813 = vpop.f32.mrf.mxu0
      %814 = vmatprep.mubr.bf16.mxu0 0
      %815 = vmatmul.mubr.bf16.gmra.mxu0 %v656
      %v816 = vpop.f32.mrf.mxu0
      %v817 = vadd.f32 0.0, %v816
      %v818 = vpop.f32.mrf.mxu0
      %v819 = vpop.f32.mrf.mxu0
      %v820 = vadd.f32 0.0, %v819
      %v821 = vpop.f32.mrf.mxu0
      %822 = vdwg.mxu0
      %v855 = vunpack.c.l.b16 %v439
      %v856 = vunpack.c.l.b16 %v440
      %v857 = vunpack.c.l.b16 %v441
      %v858 = vunpack.c.l.b16 %v442
      %v859 = vunpack.c.l.b16 %v443
      %v860 = vunpack.c.l.b16 %v444
      %v861 = vunpack.c.l.b16 %v445
      %v862 = vunpack.c.l.b16 %v446
      %v863 = vunpack.c.l.b16 %v447
      %v864 = vunpack.c.l.b16 %v448
      %v865 = vunpack.c.l.b16 %v449
      %v866 = vunpack.c.l.b16 %v450
      %v867 = vunpack.c.l.b16 %v451
      %v868 = vunpack.c.l.b16 %v452
      %v869 = vunpack.c.l.b16 %v453
      %v870 = vunpack.c.l.b16 %v454
      %v871 = vunpack.c.l.b16 %v455
      %v872 = vunpack.c.l.b16 %v456
      %v873 = vunpack.c.l.b16 %v457
      %v874 = vunpack.c.l.b16 %v458
      %v875 = vunpack.c.l.b16 %v459
      %v876 = vunpack.c.l.b16 %v460
      %v877 = vunpack.c.l.b16 %v461
      %v878 = vunpack.c.l.b16 %v462
      %v879 = vunpack.c.l.b16 %v463
      %v880 = vunpack.c.l.b16 %v464
      %v881 = vunpack.c.l.b16 %v465
      %v882 = vunpack.c.l.b16 %v466
      %v883 = vunpack.c.l.b16 %v467
      %v884 = vunpack.c.l.b16 %v468
      %v885 = vunpack.c.l.b16 %v469
      %v886 = vunpack.c.l.b16 %v470
      %v887 = vpack.c.b16 %v856, %v855
      %v888 = vpack.c.b16 %v858, %v857
      %v889 = vpack.c.b16 %v860, %v859
      %v890 = vpack.c.b16 %v862, %v861
      %v891 = vpack.c.b16 %v864, %v863
      %v892 = vpack.c.b16 %v866, %v865
      %v893 = vpack.c.b16 %v868, %v867
      %v894 = vpack.c.b16 %v870, %v869
      %v895 = vpack.c.b16 %v872, %v871
      %v896 = vpack.c.b16 %v874, %v873
      %v897 = vpack.c.b16 %v876, %v875
      %v898 = vpack.c.b16 %v878, %v877
      %v899 = vpack.c.b16 %v880, %v879
      %v900 = vpack.c.b16 %v882, %v881
      %v901 = vpack.c.b16 %v884, %v883
      %v902 = vpack.c.b16 %v886, %v885
      %v908 = vunpack.c.l.b16 %v471
      %v909 = vunpack.c.l.b16 %v472
      %v910 = vunpack.c.l.b16 %v473
      %v911 = vunpack.c.l.b16 %v474
      %v912 = vunpack.c.l.b16 %v475
      %v913 = vpack.c.b16 %v909, %v908
      %v914 = vpack.c.b16 %v911, %v910
      %v915 = vpack.c.b16 %v912, %v912
      %v919 = vsel %vm609, %v887, 0
      %v922 = vsel %vm609, %v888, 0
      %v925 = vsel %vm609, %v889, 0
      %v928 = vsel %vm609, %v890, 0
      %v931 = vsel %vm609, %v891, 0
      %v934 = vsel %vm609, %v892, 0
      %v937 = vsel %vm609, %v893, 0
      %v940 = vsel %vm609, %v894, 0
      %v943 = vsel %vm609, %v895, 0
      %v946 = vsel %vm609, %v896, 0
      %v949 = vsel %vm609, %v897, 0
      %v952 = vsel %vm609, %v898, 0
      %v955 = vsel %vm609, %v899, 0
      %v958 = vsel %vm609, %v900, 0
      %v961 = vsel %vm609, %v901, 0
      %v964 = vsel %vm609, %v902, 0
      %v967 = vsel %vm658, %v915, 0
      %969 = vmatprep.subr.bf16.mxu0 0
      %970 = vmatpush1.bf16.msra.mxu0 0
      %971 = vmatprep.subr.bf16.mxu0 0
      %972 = vmatpush1.bf16.msra.mxu0 0
      %973 = vmatprep.subr.bf16.mxu0 0
      %974 = vmatpush1.bf16.msra.mxu0 0
      %975 = vmatprep.subr.bf16.mxu0 0
      %976 = vmatpush1.bf16.msra.mxu0 0
      %977 = vmatprep.subr.bf16.mxu0 0
      %978 = vmatpush1.bf16.msra.mxu0 0
      %979 = vmatprep.subr.bf16.mxu0 0
      %980 = vmatpush1.bf16.msra.mxu0 %v967
      %981 = vmatprep.subr.bf16.mxu0 0
      %982 = vmatpush1.bf16.msra.mxu0 %v914
      %983 = vmatprep.subr.bf16.mxu0 0
      %984 = vmatpush1.bf16.msra.mxu0 %v913
      %985 = vmatprep.subr.bf16.mxu0 0
      %986 = vmatpush2.bf16.msra.mxu0 0
      %987 = vmatprep.subr.bf16.mxu0 0
      %988 = vmatpush2.bf16.msra.mxu0 0
      %989 = vmatprep.subr.bf16.mxu0 0
      %990 = vmatpush2.bf16.msra.mxu0 0
      %991 = vmatprep.subr.bf16.mxu0 0
      %992 = vmatpush2.bf16.msra.mxu0 0
      %993 = vmatprep.subr.bf16.mxu0 0
      %994 = vmatpush2.bf16.msra.mxu0 0
      %995 = vmatprep.subr.bf16.mxu0 0
      %996 = vmatpush2.bf16.msra.mxu0 0
      %997 = vmatprep.subr.bf16.mxu0 0
      %998 = vmatpush2.bf16.msra.mxu0 0
      %999 = vmatprep.subr.bf16.mxu0 0
      %1000 = vmatpush2.bf16.msra.mxu0 0
      %1001 = vmatprep.mubr.bf16.mxu0 0
      %1002 = vmatmul.mubr.bf16.gmra.mxu0 %v919
      %v1003 = vpop.f32.mrf.mxu0
      %v1004 = vadd.f32 %v697, %v1003
      %v1005 = vpop.f32.mrf.mxu0
      %v1006 = vpop.f32.mrf.mxu0
      %v1007 = vadd.f32 %v700, %v1006
      %v1008 = vpop.f32.mrf.mxu0
      %1009 = vmatprep.mubr.bf16.mxu0 0
      %1010 = vmatmul.mubr.bf16.gmra.mxu0 %v922
      %v1011 = vpop.f32.mrf.mxu0
      %v1012 = vadd.f32 %v705, %v1011
      %v1013 = vpop.f32.mrf.mxu0
      %v1014 = vpop.f32.mrf.mxu0
      %v1015 = vadd.f32 %v708, %v1014
      %v1016 = vpop.f32.mrf.mxu0
      %1017 = vmatprep.mubr.bf16.mxu0 0
      %1018 = vmatmul.mubr.bf16.gmra.mxu0 %v925
      %v1019 = vpop.f32.mrf.mxu0
      %v1020 = vadd.f32 %v713, %v1019
      %v1021 = vpop.f32.mrf.mxu0
      %v1022 = vpop.f32.mrf.mxu0
      %v1023 = vadd.f32 %v716, %v1022
      %v1024 = vpop.f32.mrf.mxu0
      %1025 = vmatprep.mubr.bf16.mxu0 0
      %1026 = vmatmul.mubr.bf16.gmra.mxu0 %v928
      %v1027 = vpop.f32.mrf.mxu0
      %v1028 = vadd.f32 %v721, %v1027
      %v1029 = vpop.f32.mrf.mxu0
      %v1030 = vpop.f32.mrf.mxu0
      %v1031 = vadd.f32 %v724, %v1030
      %v1032 = vpop.f32.mrf.mxu0
      %1033 = vmatprep.mubr.bf16.mxu0 0
      %1034 = vmatmul.mubr.bf16.gmra.mxu0 %v931
      %v1035 = vpop.f32.mrf.mxu0
      %v1036 = vadd.f32 %v729, %v1035
      %v1037 = vpop.f32.mrf.mxu0
      %v1038 = vpop.f32.mrf.mxu0
      %v1039 = vadd.f32 %v732, %v1038
      %v1040 = vpop.f32.mrf.mxu0
      %1041 = vmatprep.mubr.bf16.mxu0 0
      %1042 = vmatmul.mubr.bf16.gmra.mxu0 %v934
      %v1043 = vpop.f32.mrf.mxu0
      %v1044 = vadd.f32 %v737, %v1043
      %v1045 = vpop.f32.mrf.mxu0
      %v1046 = vpop.f32.mrf.mxu0
      %v1047 = vadd.f32 %v740, %v1046
      %v1048 = vpop.f32.mrf.mxu0
      %1049 = vmatprep.mubr.bf16.mxu0 0
      %1050 = vmatmul.mubr.bf16.gmra.mxu0 %v937
      %v1051 = vpop.f32.mrf.mxu0
      %v1052 = vadd.f32 %v745, %v1051
      %v1053 = vpop.f32.mrf.mxu0
      %v1054 = vpop.f32.mrf.mxu0
      %v1055 = vadd.f32 %v748, %v1054
      %v1056 = vpop.f32.mrf.mxu0
      %1057 = vmatprep.mubr.bf16.mxu0 0
      %1058 = vmatmul.mubr.bf16.gmra.mxu0 %v940
      %v1059 = vpop.f32.mrf.mxu0
      %v1060 = vadd.f32 %v753, %v1059
      %v1061 = vpop.f32.mrf.mxu0
      %v1062 = vpop.f32.mrf.mxu0
      %v1063 = vadd.f32 %v756, %v1062
      %v1064 = vpop.f32.mrf.mxu0
      %1065 = vmatprep.mubr.bf16.mxu0 0
      %1066 = vmatmul.mubr.bf16.gmra.mxu0 %v943
      %v1067 = vpop.f32.mrf.mxu0
      %v1068 = vadd.f32 %v761, %v1067
      %v1069 = vpop.f32.mrf.mxu0
      %v1070 = vpop.f32.mrf.mxu0
      %v1071 = vadd.f32 %v764, %v1070
      %v1072 = vpop.f32.mrf.mxu0
      %1073 = vmatprep.mubr.bf16.mxu0 0
      %1074 = vmatmul.mubr.bf16.gmra.mxu0 %v946
      %v1075 = vpop.f32.mrf.mxu0
      %v1076 = vadd.f32 %v769, %v1075
      %v1077 = vpop.f32.mrf.mxu0
      %v1078 = vpop.f32.mrf.mxu0
      %v1079 = vadd.f32 %v772, %v1078
      %v1080 = vpop.f32.mrf.mxu0
      %1081 = vmatprep.mubr.bf16.mxu0 0
      %1082 = vmatmul.mubr.bf16.gmra.mxu0 %v949
      %v1083 = vpop.f32.mrf.mxu0
      %v1084 = vadd.f32 %v777, %v1083
      %v1085 = vpop.f32.mrf.mxu0
      %v1086 = vpop.f32.mrf.mxu0
      %v1087 = vadd.f32 %v780, %v1086
      %v1088 = vpop.f32.mrf.mxu0
      %1089 = vmatprep.mubr.bf16.mxu0 0
      %1090 = vmatmul.mubr.bf16.gmra.mxu0 %v952
      %v1091 = vpop.f32.mrf.mxu0
      %v1092 = vadd.f32 %v785, %v1091
      %v1093 = vpop.f32.mrf.mxu0
      %v1094 = vpop.f32.mrf.mxu0
      %v1095 = vadd.f32 %v788, %v1094
      %v1096 = vpop.f32.mrf.mxu0
      %1097 = vmatprep.mubr.bf16.mxu0 0
      %1098 = vmatmul.mubr.bf16.gmra.mxu0 %v955
      %v1099 = vpop.f32.mrf.mxu0
      %v1100 = vadd.f32 %v793, %v1099
      %v1101 = vpop.f32.mrf.mxu0
      %v1102 = vpop.f32.mrf.mxu0
      %v1103 = vadd.f32 %v796, %v1102
      %v1104 = vpop.f32.mrf.mxu0
      %1105 = vmatprep.mubr.bf16.mxu0 0
      %1106 = vmatmul.mubr.bf16.gmra.mxu0 %v958
      %v1107 = vpop.f32.mrf.mxu0
      %v1108 = vadd.f32 %v801, %v1107
      %v1109 = vpop.f32.mrf.mxu0
      %v1110 = vpop.f32.mrf.mxu0
      %v1111 = vadd.f32 %v804, %v1110
      %v1112 = vpop.f32.mrf.mxu0
      %1113 = vmatprep.mubr.bf16.mxu0 0
      %1114 = vmatmul.mubr.bf16.gmra.mxu0 %v961
      %v1115 = vpop.f32.mrf.mxu0
      %v1116 = vadd.f32 %v809, %v1115
      %v1117 = vpop.f32.mrf.mxu0
      %v1118 = vpop.f32.mrf.mxu0
      %v1119 = vadd.f32 %v812, %v1118
      %v1120 = vpop.f32.mrf.mxu0
      %1121 = vmatprep.mubr.bf16.mxu0 0
      %1122 = vmatmul.mubr.bf16.gmra.mxu0 %v964
      %v1123 = vpop.f32.mrf.mxu0
      %v1124 = vadd.f32 %v817, %v1123
      %v1125 = vpop.f32.mrf.mxu0
      %v1126 = vpop.f32.mrf.mxu0
      %v1127 = vadd.f32 %v820, %v1126
      %v1128 = vpop.f32.mrf.mxu0
      %1129 = vdwg.mxu0
      %v1130 = vld [vmem:[%s410] sm:$0xf]
      %v1131 = vld [vmem:[%s410 + $0x4] sm:$0xf]
      %v1132 = vld [vmem:[%s410 + $0x8] sm:$0xf]
      %v1133 = vld [vmem:[%s410 + $0xc] sm:$0xf]
      %v1134 = vld [vmem:[%s410 + $0x10] sm:$0xf]
      %v1135 = vld [vmem:[%s410 + $0x14] sm:$0xf]
      %v1136 = vld [vmem:[%s410 + $0x18] sm:$0xf]
      %v1137 = vld [vmem:[%s410 + $0x1c] sm:$0xf]
      %v1138 = vld [vmem:[%s410 + $0x20] sm:$0xf]
      %v1139 = vld [vmem:[%s410 + $0x24] sm:$0xf]
      %v1140 = vld [vmem:[%s410 + $0x28] sm:$0xf]
      %v1141 = vld [vmem:[%s410 + $0x2c] sm:$0xf]
      %v1142 = vld [vmem:[%s410 + $0x30] sm:$0xf]
      %v1143 = vld [vmem:[%s410 + $0x34] sm:$0xf]
      %v1144 = vld [vmem:[%s410 + $0x38] sm:$0xf]
      %v1145 = vld [vmem:[%s410 + $0x3c] sm:$0xf]
      %v1146 = vld [vmem:[%s410 + $0x40] sm:$0xf]
      %v1147 = vld [vmem:[%s410 + $0x44] sm:$0xf]
      %v1148 = vld [vmem:[%s410 + $0x48] sm:$0xf]
      %v1149 = vld [vmem:[%s410 + $0x4c] sm:$0xf]
      %v1150 = vld [vmem:[%s410 + $0x50] sm:$0xf]
      %v1151 = vld [vmem:[%s410 + $0x54] sm:$0xf]
      %v1152 = vld [vmem:[%s410 + $0x58] sm:$0xf]
      %v1153 = vld [vmem:[%s410 + $0x5c] sm:$0xf]
      %v1154 = vld [vmem:[%s410 + $0x60] sm:$0xf]
      %v1155 = vld [vmem:[%s410 + $0x64] sm:$0xf]
      %v1156 = vld [vmem:[%s410 + $0x68] sm:$0xf]
      %v1157 = vld [vmem:[%s410 + $0x6c] sm:$0xf]
      %v1158 = vld [vmem:[%s410 + $0x70] sm:$0xf]
      %v1159 = vld [vmem:[%s410 + $0x74] sm:$0xf]
      %v1160 = vld [vmem:[%s410 + $0x78] sm:$0xf]
      %v1161 = vld [vmem:[%s410 + $0x7c] sm:$0xf]
      %s1162 = scalar_lea.vmem %s3, 40
      %v1163 = vld [vmem:[%s1162] sm:$0xf]
      %v1164 = vld [vmem:[%s1162 + $0x4] sm:$0xf]
      %v1165 = vld [vmem:[%s1162 + $0x8] sm:$0xf]
      %v1166 = vld [vmem:[%s1162 + $0xc] sm:$0xf]
      %v1167 = vld [vmem:[%s1162 + $0x10] sm:$0x3]
      %v1200 = vunpack.c.l.b16 %v1130
      %v1201 = vunpack.c.l.b16 %v1131
      %v1202 = vunpack.c.l.b16 %v1132
      %v1203 = vunpack.c.l.b16 %v1133
      %v1204 = vunpack.c.l.b16 %v1134
      %v1205 = vunpack.c.l.b16 %v1135
      %v1206 = vunpack.c.l.b16 %v1136
      %v1207 = vunpack.c.l.b16 %v1137
      %v1208 = vunpack.c.l.b16 %v1138
      %v1209 = vunpack.c.l.b16 %v1139
      %v1210 = vunpack.c.l.b16 %v1140
      %v1211 = vunpack.c.l.b16 %v1141
      %v1212 = vunpack.c.l.b16 %v1142
      %v1213 = vunpack.c.l.b16 %v1143
      %v1214 = vunpack.c.l.b16 %v1144
      %v1215 = vunpack.c.l.b16 %v1145
      %v1216 = vunpack.c.l.b16 %v1146
      %v1217 = vunpack.c.l.b16 %v1147
      %v1218 = vunpack.c.l.b16 %v1148
      %v1219 = vunpack.c.l.b16 %v1149
      %v1220 = vunpack.c.l.b16 %v1150
      %v1221 = vunpack.c.l.b16 %v1151
      %v1222 = vunpack.c.l.b16 %v1152
      %v1223 = vunpack.c.l.b16 %v1153
      %v1224 = vunpack.c.l.b16 %v1154
      %v1225 = vunpack.c.l.b16 %v1155
      %v1226 = vunpack.c.l.b16 %v1156
      %v1227 = vunpack.c.l.b16 %v1157
      %v1228 = vunpack.c.l.b16 %v1158
      %v1229 = vunpack.c.l.b16 %v1159
      %v1230 = vunpack.c.l.b16 %v1160
      %v1231 = vunpack.c.l.b16 %v1161
      %v1232 = vpack.c.b16 %v1201, %v1200
      %v1233 = vpack.c.b16 %v1203, %v1202
      %v1234 = vpack.c.b16 %v1205, %v1204
      %v1235 = vpack.c.b16 %v1207, %v1206
      %v1236 = vpack.c.b16 %v1209, %v1208
      %v1237 = vpack.c.b16 %v1211, %v1210
      %v1238 = vpack.c.b16 %v1213, %v1212
      %v1239 = vpack.c.b16 %v1215, %v1214
      %v1240 = vpack.c.b16 %v1217, %v1216
      %v1241 = vpack.c.b16 %v1219, %v1218
      %v1242 = vpack.c.b16 %v1221, %v1220
      %v1243 = vpack.c.b16 %v1223, %v1222
      %v1244 = vpack.c.b16 %v1225, %v1224
      %v1245 = vpack.c.b16 %v1227, %v1226
      %v1246 = vpack.c.b16 %v1229, %v1228
      %v1247 = vpack.c.b16 %v1231, %v1230
      %v1253 = vunpack.c.l.b16 %v1163
      %v1254 = vunpack.c.l.b16 %v1164
      %v1255 = vunpack.c.l.b16 %v1165
      %v1256 = vunpack.c.l.b16 %v1166
      %v1257 = vunpack.c.l.b16 %v1167
      %v1258 = vpack.c.b16 %v1254, %v1253
      %v1259 = vpack.c.b16 %v1256, %v1255
      %v1260 = vpack.c.b16 %v1257, %v1257
      %v1264 = vsel %vm609, %v1232, 0
      %v1267 = vsel %vm609, %v1233, 0
      %v1270 = vsel %vm609, %v1234, 0
      %v1273 = vsel %vm609, %v1235, 0
      %v1276 = vsel %vm609, %v1236, 0
      %v1279 = vsel %vm609, %v1237, 0
      %v1282 = vsel %vm609, %v1238, 0
      %v1285 = vsel %vm609, %v1239, 0
      %v1288 = vsel %vm609, %v1240, 0
      %v1291 = vsel %vm609, %v1241, 0
      %v1294 = vsel %vm609, %v1242, 0
      %v1297 = vsel %vm609, %v1243, 0
      %v1300 = vsel %vm609, %v1244, 0
      %v1303 = vsel %vm609, %v1245, 0
      %v1306 = vsel %vm609, %v1246, 0
      %v1309 = vsel %vm609, %v1247, 0
      %v1312 = vsel %vm658, %v1260, 0
      %1314 = vmatprep.subr.bf16.mxu0 0
      %1315 = vmatpush1.bf16.msra.mxu0 0
      %1316 = vmatprep.subr.bf16.mxu0 0
      %1317 = vmatpush1.bf16.msra.mxu0 0
      %1318 = vmatprep.subr.bf16.mxu0 0
      %1319 = vmatpush1.bf16.msra.mxu0 0
      %1320 = vmatprep.subr.bf16.mxu0 0
      %1321 = vmatpush1.bf16.msra.mxu0 0
      %1322 = vmatprep.subr.bf16.mxu0 0
      %1323 = vmatpush1.bf16.msra.mxu0 0
      %1324 = vmatprep.subr.bf16.mxu0 0
      %1325 = vmatpush1.bf16.msra.mxu0 %v1312
      %1326 = vmatprep.subr.bf16.mxu0 0
      %1327 = vmatpush1.bf16.msra.mxu0 %v1259
      %1328 = vmatprep.subr.bf16.mxu0 0
      %1329 = vmatpush1.bf16.msra.mxu0 %v1258
      %1330 = vmatprep.subr.bf16.mxu0 0
      %1331 = vmatpush2.bf16.msra.mxu0 0
      %1332 = vmatprep.subr.bf16.mxu0 0
      %1333 = vmatpush2.bf16.msra.mxu0 0
      %1334 = vmatprep.subr.bf16.mxu0 0
      %1335 = vmatpush2.bf16.msra.mxu0 0
      %1336 = vmatprep.subr.bf16.mxu0 0
      %1337 = vmatpush2.bf16.msra.mxu0 0
      %1338 = vmatprep.subr.bf16.mxu0 0
      %1339 = vmatpush2.bf16.msra.mxu0 0
      %1340 = vmatprep.subr.bf16.mxu0 0
      %1341 = vmatpush2.bf16.msra.mxu0 0
      %1342 = vmatprep.subr.bf16.mxu0 0
      %1343 = vmatpush2.bf16.msra.mxu0 0
      %1344 = vmatprep.subr.bf16.mxu0 0
      %1345 = vmatpush2.bf16.msra.mxu0 0
      %1346 = vmatprep.mubr.bf16.mxu0 0
      %1347 = vmatmul.mubr.bf16.gmra.mxu0 %v1264
      %v1348 = vpop.f32.mrf.mxu0
      %v1349 = vadd.f32 0.0, %v1348
      %v1350 = vpop.f32.mrf.mxu0
      %v1351 = vpop.f32.mrf.mxu0
      %v1352 = vadd.f32 0.0, %v1351
      %v1353 = vpop.f32.mrf.mxu0
      %1354 = vmatprep.mubr.bf16.mxu0 0
      %1355 = vmatmul.mubr.bf16.gmra.mxu0 %v1267
      %v1356 = vpop.f32.mrf.mxu0
      %v1357 = vadd.f32 0.0, %v1356
      %v1358 = vpop.f32.mrf.mxu0
      %v1359 = vpop.f32.mrf.mxu0
      %v1360 = vadd.f32 0.0, %v1359
      %v1361 = vpop.f32.mrf.mxu0
      %1362 = vmatprep.mubr.bf16.mxu0 0
      %1363 = vmatmul.mubr.bf16.gmra.mxu0 %v1270
      %v1364 = vpop.f32.mrf.mxu0
      %v1365 = vadd.f32 0.0, %v1364
      %v1366 = vpop.f32.mrf.mxu0
      %v1367 = vpop.f32.mrf.mxu0
      %v1368 = vadd.f32 0.0, %v1367
      %v1369 = vpop.f32.mrf.mxu0
      %1370 = vmatprep.mubr.bf16.mxu0 0
      %1371 = vmatmul.mubr.bf16.gmra.mxu0 %v1273
      %v1372 = vpop.f32.mrf.mxu0
      %v1373 = vadd.f32 0.0, %v1372
      %v1374 = vpop.f32.mrf.mxu0
      %v1375 = vpop.f32.mrf.mxu0
      %v1376 = vadd.f32 0.0, %v1375
      %v1377 = vpop.f32.mrf.mxu0
      %1378 = vmatprep.mubr.bf16.mxu0 0
      %1379 = vmatmul.mubr.bf16.gmra.mxu0 %v1276
      %v1380 = vpop.f32.mrf.mxu0
      %v1381 = vadd.f32 0.0, %v1380
      %v1382 = vpop.f32.mrf.mxu0
      %v1383 = vpop.f32.mrf.mxu0
      %v1384 = vadd.f32 0.0, %v1383
      %v1385 = vpop.f32.mrf.mxu0
      %1386 = vmatprep.mubr.bf16.mxu0 0
      %1387 = vmatmul.mubr.bf16.gmra.mxu0 %v1279
      %v1388 = vpop.f32.mrf.mxu0
      %v1389 = vadd.f32 0.0, %v1388
      %v1390 = vpop.f32.mrf.mxu0
      %v1391 = vpop.f32.mrf.mxu0
      %v1392 = vadd.f32 0.0, %v1391
      %v1393 = vpop.f32.mrf.mxu0
      %1394 = vmatprep.mubr.bf16.mxu0 0
      %1395 = vmatmul.mubr.bf16.gmra.mxu0 %v1282
      %v1396 = vpop.f32.mrf.mxu0
      %v1397 = vadd.f32 0.0, %v1396
      %v1398 = vpop.f32.mrf.mxu0
      %v1399 = vpop.f32.mrf.mxu0
      %v1400 = vadd.f32 0.0, %v1399
      %v1401 = vpop.f32.mrf.mxu0
      %1402 = vmatprep.mubr.bf16.mxu0 0
      %1403 = vmatmul.mubr.bf16.gmra.mxu0 %v1285
      %v1404 = vpop.f32.mrf.mxu0
      %v1405 = vadd.f32 0.0, %v1404
      %v1406 = vpop.f32.mrf.mxu0
      %v1407 = vpop.f32.mrf.mxu0
      %v1408 = vadd.f32 0.0, %v1407
      %v1409 = vpop.f32.mrf.mxu0
      %1410 = vmatprep.mubr.bf16.mxu0 0
      %1411 = vmatmul.mubr.bf16.gmra.mxu0 %v1288
      %v1412 = vpop.f32.mrf.mxu0
      %v1413 = vadd.f32 0.0, %v1412
      %v1414 = vpop.f32.mrf.mxu0
      %v1415 = vpop.f32.mrf.mxu0
      %v1416 = vadd.f32 0.0, %v1415
      %v1417 = vpop.f32.mrf.mxu0
      %1418 = vmatprep.mubr.bf16.mxu0 0
      %1419 = vmatmul.mubr.bf16.gmra.mxu0 %v1291
      %v1420 = vpop.f32.mrf.mxu0
      %v1421 = vadd.f32 0.0, %v1420
      %v1422 = vpop.f32.mrf.mxu0
      %v1423 = vpop.f32.mrf.mxu0
      %v1424 = vadd.f32 0.0, %v1423
      %v1425 = vpop.f32.mrf.mxu0
      %1426 = vmatprep.mubr.bf16.mxu0 0
      %1427 = vmatmul.mubr.bf16.gmra.mxu0 %v1294
      %v1428 = vpop.f32.mrf.mxu0
      %v1429 = vadd.f32 0.0, %v1428
      %v1430 = vpop.f32.mrf.mxu0
      %v1431 = vpop.f32.mrf.mxu0
      %v1432 = vadd.f32 0.0, %v1431
      %v1433 = vpop.f32.mrf.mxu0
      %1434 = vmatprep.mubr.bf16.mxu0 0
      %1435 = vmatmul.mubr.bf16.gmra.mxu0 %v1297
      %v1436 = vpop.f32.mrf.mxu0
      %v1437 = vadd.f32 0.0, %v1436
      %v1438 = vpop.f32.mrf.mxu0
      %v1439 = vpop.f32.mrf.mxu0
      %v1440 = vadd.f32 0.0, %v1439
      %v1441 = vpop.f32.mrf.mxu0
      %1442 = vmatprep.mubr.bf16.mxu0 0
      %1443 = vmatmul.mubr.bf16.gmra.mxu0 %v1300
      %v1444 = vpop.f32.mrf.mxu0
      %v1445 = vadd.f32 0.0, %v1444
      %v1446 = vpop.f32.mrf.mxu0
      %v1447 = vpop.f32.mrf.mxu0
      %v1448 = vadd.f32 0.0, %v1447
      %v1449 = vpop.f32.mrf.mxu0
      %1450 = vmatprep.mubr.bf16.mxu0 0
      %1451 = vmatmul.mubr.bf16.gmra.mxu0 %v1303
      %v1452 = vpop.f32.mrf.mxu0
      %v1453 = vadd.f32 0.0, %v1452
      %v1454 = vpop.f32.mrf.mxu0
      %v1455 = vpop.f32.mrf.mxu0
      %v1456 = vadd.f32 0.0, %v1455
      %v1457 = vpop.f32.mrf.mxu0
      %1458 = vmatprep.mubr.bf16.mxu0 0
      %1459 = vmatmul.mubr.bf16.gmra.mxu0 %v1306
      %v1460 = vpop.f32.mrf.mxu0
      %v1461 = vadd.f32 0.0, %v1460
      %v1462 = vpop.f32.mrf.mxu0
      %v1463 = vpop.f32.mrf.mxu0
      %v1464 = vadd.f32 0.0, %v1463
      %v1465 = vpop.f32.mrf.mxu0
      %1466 = vmatprep.mubr.bf16.mxu0 0
      %1467 = vmatmul.mubr.bf16.gmra.mxu0 %v1309
      %v1468 = vpop.f32.mrf.mxu0
      %v1469 = vadd.f32 0.0, %v1468
      %v1470 = vpop.f32.mrf.mxu0
      %v1471 = vpop.f32.mrf.mxu0
      %v1472 = vadd.f32 0.0, %v1471
      %v1473 = vpop.f32.mrf.mxu0
      %1474 = vdwg.mxu0
      %v1475 = vadd.f32 %v1004, %v1349
      %v1476 = vadd.f32 %v1007, %v1352
      %v1477 = vadd.f32 %v1012, %v1357
      %v1478 = vadd.f32 %v1015, %v1360
      %v1479 = vadd.f32 %v1020, %v1365
      %v1480 = vadd.f32 %v1023, %v1368
      %v1481 = vadd.f32 %v1028, %v1373
      %v1482 = vadd.f32 %v1031, %v1376
      %v1483 = vadd.f32 %v1036, %v1381
      %v1484 = vadd.f32 %v1039, %v1384
      %v1485 = vadd.f32 %v1044, %v1389
      %v1486 = vadd.f32 %v1047, %v1392
      %v1487 = vadd.f32 %v1052, %v1397
      %v1488 = vadd.f32 %v1055, %v1400
      %v1489 = vadd.f32 %v1060, %v1405
      %v1490 = vadd.f32 %v1063, %v1408
      %v1491 = vadd.f32 %v1068, %v1413
      %v1492 = vadd.f32 %v1071, %v1416
      %v1493 = vadd.f32 %v1076, %v1421
      %v1494 = vadd.f32 %v1079, %v1424
      %v1495 = vadd.f32 %v1084, %v1429
      %v1496 = vadd.f32 %v1087, %v1432
      %v1497 = vadd.f32 %v1092, %v1437
      %v1498 = vadd.f32 %v1095, %v1440
      %v1499 = vadd.f32 %v1100, %v1445
      %v1500 = vadd.f32 %v1103, %v1448
      %v1501 = vadd.f32 %v1108, %v1453
      %v1502 = vadd.f32 %v1111, %v1456
      %v1503 = vadd.f32 %v1116, %v1461
      %v1504 = vadd.f32 %v1119, %v1464
      %v1505 = vadd.f32 %v1124, %v1469
      %v1506 = vadd.f32 %v1127, %v1472
      %v1507 = vpack.c.bf16 %v1476, %v1475
      %v1508 = vpack.c.bf16 %v1478, %v1477
      %v1509 = vpack.c.bf16 %v1480, %v1479
      %v1510 = vpack.c.bf16 %v1482, %v1481
      %v1511 = vpack.c.bf16 %v1484, %v1483
      %v1512 = vpack.c.bf16 %v1486, %v1485
      %v1513 = vpack.c.bf16 %v1488, %v1487
      %v1514 = vpack.c.bf16 %v1490, %v1489
      %v1515 = vpack.c.bf16 %v1492, %v1491
      %v1516 = vpack.c.bf16 %v1494, %v1493
      %v1517 = vpack.c.bf16 %v1496, %v1495
      %v1518 = vpack.c.bf16 %v1498, %v1497
      %v1519 = vpack.c.bf16 %v1500, %v1499
      %v1520 = vpack.c.bf16 %v1502, %v1501
      %v1521 = vpack.c.bf16 %v1504, %v1503
      %v1522 = vpack.c.bf16 %v1506, %v1505
      %v1539 = vunpack.c.l.b16 %v1507
      %v1540 = vunpack.c.h.b16 %v1507
      %v1541 = vunpack.c.l.b16 %v1508
      %v1542 = vunpack.c.h.b16 %v1508
      %v1543 = vunpack.c.l.b16 %v1509
      %v1544 = vunpack.c.h.b16 %v1509
      %v1545 = vunpack.c.l.b16 %v1510
      %v1546 = vunpack.c.h.b16 %v1510
      %v1547 = vunpack.c.l.b16 %v1511
      %v1548 = vunpack.c.h.b16 %v1511
      %v1549 = vunpack.c.l.b16 %v1512
      %v1550 = vunpack.c.h.b16 %v1512
      %v1551 = vunpack.c.l.b16 %v1513
      %v1552 = vunpack.c.h.b16 %v1513
      %v1553 = vunpack.c.l.b16 %v1514
      %v1554 = vunpack.c.h.b16 %v1514
      %v1555 = vunpack.c.l.b16 %v1515
      %v1556 = vunpack.c.h.b16 %v1515
      %v1557 = vunpack.c.l.b16 %v1516
      %v1558 = vunpack.c.h.b16 %v1516
      %v1559 = vunpack.c.l.b16 %v1517
      %v1560 = vunpack.c.h.b16 %v1517
      %v1561 = vunpack.c.l.b16 %v1518
      %v1562 = vunpack.c.h.b16 %v1518
      %v1563 = vunpack.c.l.b16 %v1519
      %v1564 = vunpack.c.h.b16 %v1519
      %v1565 = vunpack.c.l.b16 %v1520
      %v1566 = vunpack.c.h.b16 %v1520
      %v1567 = vunpack.c.l.b16 %v1521
      %v1568 = vunpack.c.h.b16 %v1521
      %v1569 = vunpack.c.l.b16 %v1522
      %v1570 = vunpack.c.h.b16 %v1522
      %v1571 = vpack.c.b16 %v1539, %v1539
      %v1572 = vpack.c.b16 %v1540, %v1540
      %v1573 = vpack.c.b16 %v1541, %v1541
      %v1574 = vpack.c.b16 %v1542, %v1542
      %v1575 = vpack.c.b16 %v1543, %v1543
      %v1576 = vpack.c.b16 %v1544, %v1544
      %v1577 = vpack.c.b16 %v1545, %v1545
      %v1578 = vpack.c.b16 %v1546, %v1546
      %v1579 = vpack.c.b16 %v1547, %v1547
      %v1580 = vpack.c.b16 %v1548, %v1548
      %v1581 = vpack.c.b16 %v1549, %v1549
      %v1582 = vpack.c.b16 %v1550, %v1550
      %v1583 = vpack.c.b16 %v1551, %v1551
      %v1584 = vpack.c.b16 %v1552, %v1552
      %v1585 = vpack.c.b16 %v1553, %v1553
      %v1586 = vpack.c.b16 %v1554, %v1554
      %v1587 = vpack.c.b16 %v1555, %v1555
      %v1588 = vpack.c.b16 %v1556, %v1556
      %v1589 = vpack.c.b16 %v1557, %v1557
      %v1590 = vpack.c.b16 %v1558, %v1558
      %v1591 = vpack.c.b16 %v1559, %v1559
      %v1592 = vpack.c.b16 %v1560, %v1560
      %v1593 = vpack.c.b16 %v1561, %v1561
      %v1594 = vpack.c.b16 %v1562, %v1562
      %v1595 = vpack.c.b16 %v1563, %v1563
      %v1596 = vpack.c.b16 %v1564, %v1564
      %v1597 = vpack.c.b16 %v1565, %v1565
      %v1598 = vpack.c.b16 %v1566, %v1566
      %v1599 = vpack.c.b16 %v1567, %v1567
      %v1600 = vpack.c.b16 %v1568, %v1568
      %v1601 = vpack.c.b16 %v1569, %v1569
      %v1602 = vpack.c.b16 %v1570, %v1570
      %1635 = vst [vmem:[%s425] sm:$0xf] %v1571
      %1636 = vst [vmem:[%s425 + $0x4] sm:$0xf] %v1572
      %1637 = vst [vmem:[%s425 + $0x8] sm:$0xf] %v1573
      %1638 = vst [vmem:[%s425 + $0xc] sm:$0xf] %v1574
      %1639 = vst [vmem:[%s425 + $0x10] sm:$0xf] %v1575
      %1640 = vst [vmem:[%s425 + $0x14] sm:$0xf] %v1576
      %1641 = vst [vmem:[%s425 + $0x18] sm:$0xf] %v1577
      %1642 = vst [vmem:[%s425 + $0x1c] sm:$0xf] %v1578
      %1643 = vst [vmem:[%s425 + $0x20] sm:$0xf] %v1579
      %1644 = vst [vmem:[%s425 + $0x24] sm:$0xf] %v1580
      %1645 = vst [vmem:[%s425 + $0x28] sm:$0xf] %v1581
      %1646 = vst [vmem:[%s425 + $0x2c] sm:$0xf] %v1582
      %1647 = vst [vmem:[%s425 + $0x30] sm:$0xf] %v1583
      %1648 = vst [vmem:[%s425 + $0x34] sm:$0xf] %v1584
      %1649 = vst [vmem:[%s425 + $0x38] sm:$0xf] %v1585
      %1650 = vst [vmem:[%s425 + $0x3c] sm:$0xf] %v1586
      %1651 = vst [vmem:[%s425 + $0x40] sm:$0xf] %v1587
      %1652 = vst [vmem:[%s425 + $0x44] sm:$0xf] %v1588
      %1653 = vst [vmem:[%s425 + $0x48] sm:$0xf] %v1589
      %1654 = vst [vmem:[%s425 + $0x4c] sm:$0xf] %v1590
      %1655 = vst [vmem:[%s425 + $0x50] sm:$0xf] %v1591
      %1656 = vst [vmem:[%s425 + $0x54] sm:$0xf] %v1592
      %1657 = vst [vmem:[%s425 + $0x58] sm:$0xf] %v1593
      %1658 = vst [vmem:[%s425 + $0x5c] sm:$0xf] %v1594
      %1659 = vst [vmem:[%s425 + $0x60] sm:$0xf] %v1595
      %1660 = vst [vmem:[%s425 + $0x64] sm:$0xf] %v1596
      %1661 = vst [vmem:[%s425 + $0x68] sm:$0xf] %v1597
      %1662 = vst [vmem:[%s425 + $0x6c] sm:$0xf] %v1598
      %1663 = vst [vmem:[%s425 + $0x70] sm:$0xf] %v1599
      %1664 = vst [vmem:[%s425 + $0x74] sm:$0xf] %v1600
      %1665 = vst [vmem:[%s425 + $0x78] sm:$0xf] %v1601
      %1666 = vst [vmem:[%s425 + $0x7c] sm:$0xf] %v1602
      %v1667 = vadd.f32 %v1475, %v1476
      %v1668 = vadd.f32 %v1667, %v1477
      %v1669 = vadd.f32 %v1668, %v1478
      %v1670 = vadd.f32 %v1669, %v1479
      %v1671 = vadd.f32 %v1670, %v1480
      %v1672 = vadd.f32 %v1671, %v1481
      %v1673 = vadd.f32 %v1672, %v1482
      %v1674 = vadd.f32 %v1673, %v1483
      %v1675 = vadd.f32 %v1674, %v1484
      %v1676 = vadd.f32 %v1675, %v1485
      %v1677 = vadd.f32 %v1676, %v1486
      %v1678 = vadd.f32 %v1677, %v1487
      %v1679 = vadd.f32 %v1678, %v1488
      %v1680 = vadd.f32 %v1679, %v1489
      %v1681 = vadd.f32 %v1680, %v1490
      %v1682 = vadd.f32 %v1681, %v1491
      %v1683 = vadd.f32 %v1682, %v1492
      %v1684 = vadd.f32 %v1683, %v1493
      %v1685 = vadd.f32 %v1684, %v1494
      %v1686 = vadd.f32 %v1685, %v1495
      %v1687 = vadd.f32 %v1686, %v1496
      %v1688 = vadd.f32 %v1687, %v1497
      %v1689 = vadd.f32 %v1688, %v1498
      %v1690 = vadd.f32 %v1689, %v1499
      %v1691 = vadd.f32 %v1690, %v1500
      %v1692 = vadd.f32 %v1691, %v1501
      %v1693 = vadd.f32 %v1692, %v1502
      %v1694 = vadd.f32 %v1693, %v1503
      %v1695 = vadd.f32 %v1694, %v1504
      %v1696 = vadd.f32 %v1695, %v1505
      %v1697 = vadd.f32 %v1696, %v1506
      %v1698 = vrot.slane %v1697, 4
      %v1699 = vadd.f32 %v1697, %v1698
      %v1700 = vrot.slane %v1699, 2
      %v1701 = vadd.f32 %v1699, %v1700
      %v1702 = vrot.slane %v1701, 1
      %v1703 = vadd.f32 %v1701, %v1702
      %v1704 = vmul.f32 %v1475, %v1475
      %v1705 = vmul.f32 %v1476, %v1476
      %v1706 = vmul.f32 %v1477, %v1477
      %v1707 = vmul.f32 %v1478, %v1478
      %v1708 = vmul.f32 %v1479, %v1479
      %v1709 = vmul.f32 %v1480, %v1480
      %v1710 = vmul.f32 %v1481, %v1481
      %v1711 = vmul.f32 %v1482, %v1482
      %v1712 = vmul.f32 %v1483, %v1483
      %v1713 = vmul.f32 %v1484, %v1484
      %v1714 = vmul.f32 %v1485, %v1485
      %v1715 = vmul.f32 %v1486, %v1486
      %v1716 = vmul.f32 %v1487, %v1487
      %v1717 = vmul.f32 %v1488, %v1488
      %v1718 = vmul.f32 %v1489, %v1489
      %v1719 = vmul.f32 %v1490, %v1490
      %v1720 = vmul.f32 %v1491, %v1491
      %v1721 = vmul.f32 %v1492, %v1492
      %v1722 = vmul.f32 %v1493, %v1493
      %v1723 = vmul.f32 %v1494, %v1494
      %v1724 = vmul.f32 %v1495, %v1495
      %v1725 = vmul.f32 %v1496, %v1496
      %v1726 = vmul.f32 %v1497, %v1497
      %v1727 = vmul.f32 %v1498, %v1498
      %v1728 = vmul.f32 %v1499, %v1499
      %v1729 = vmul.f32 %v1500, %v1500
      %v1730 = vmul.f32 %v1501, %v1501
      %v1731 = vmul.f32 %v1502, %v1502
      %v1732 = vmul.f32 %v1503, %v1503
      %v1733 = vmul.f32 %v1504, %v1504
      %v1734 = vmul.f32 %v1505, %v1505
      %v1735 = vmul.f32 %v1506, %v1506
      %v1736 = vadd.f32 %v1704, %v1705
      %v1737 = vadd.f32 %v1736, %v1706
      %v1738 = vadd.f32 %v1737, %v1707
      %v1739 = vadd.f32 %v1738, %v1708
      %v1740 = vadd.f32 %v1739, %v1709
      %v1741 = vadd.f32 %v1740, %v1710
      %v1742 = vadd.f32 %v1741, %v1711
      %v1743 = vadd.f32 %v1742, %v1712
      %v1744 = vadd.f32 %v1743, %v1713
      %v1745 = vadd.f32 %v1744, %v1714
      %v1746 = vadd.f32 %v1745, %v1715
      %v1747 = vadd.f32 %v1746, %v1716
      %v1748 = vadd.f32 %v1747, %v1717
      %v1749 = vadd.f32 %v1748, %v1718
      %v1750 = vadd.f32 %v1749, %v1719
      %v1751 = vadd.f32 %v1750, %v1720
      %v1752 = vadd.f32 %v1751, %v1721
      %v1753 = vadd.f32 %v1752, %v1722
      %v1754 = vadd.f32 %v1753, %v1723
      %v1755 = vadd.f32 %v1754, %v1724
      %v1756 = vadd.f32 %v1755, %v1725
      %v1757 = vadd.f32 %v1756, %v1726
      %v1758 = vadd.f32 %v1757, %v1727
      %v1759 = vadd.f32 %v1758, %v1728
      %v1760 = vadd.f32 %v1759, %v1729
      %v1761 = vadd.f32 %v1760, %v1730
      %v1762 = vadd.f32 %v1761, %v1731
      %v1763 = vadd.f32 %v1762, %v1732
      %v1764 = vadd.f32 %v1763, %v1733
      %v1765 = vadd.f32 %v1764, %v1734
      %v1766 = vadd.f32 %v1765, %v1735
      %v1767 = vrot.slane %v1766, 4
      %v1768 = vadd.f32 %v1766, %v1767
      %v1769 = vrot.slane %v1768, 2
      %v1770 = vadd.f32 %v1768, %v1769
      %v1771 = vrot.slane %v1770, 1
      %v1772 = vadd.f32 %v1770, %v1771
      %v1773 = vlaneseq
      %v1774 = vshrl.u32 %v1773, 7
      %vm1775 = vcmp.eq.s32.totalorder %v1774, 0
      %vm1776 = vcmp.eq.s32.totalorder %v1774, 1
      %v1777 = vsel %vm1776, %v1772, 0.0
      %v1778 = vsel %vm1775, %v1703, %v1777
      %1779 = vst [vmem:[%s437] sm:$0xff] %v1778
      %s1780 = smul.u32 32, %s24
      %p1781 = scmp.lt.s32.totalorder %s22, 1
      %s1782 = scalar_select %p1781, %s22, 1
      %p1783 = scmp.lt.s32.totalorder %s23, 15
      %s1784 = scalar_select %p1783, %s23, 15
      %p1785 = scmp.lt.s32.totalorder %s1780, 31
      %s1786 = scalar_select %p1785, %s1780, 31
      %s1787 = smul.addr %s1784, 32
      %s1788 = sadd.s32 %s1786, %s1787
      %s1789 = smul.addr %s1782, 512
      %s1790 = sadd.s32 %s1788, %s1789
      %s1791 = smul.addr %s1790, 4
      %s1792 = scalar_lea.vmem %s4, %s1791
      %p1793 = scmp.lt.s32.totalorder %s22, 1
      %s1794 = scalar_select %p1793, %s22, 1
      %p1795 = scmp.lt.s32.totalorder %s23, 15
      %s1796 = scalar_select %p1795, %s23, 15
      %p1797 = scmp.lt.s32.totalorder %s24, 0
      %s1798 = scalar_select %p1797, %s24, 0
      %s1799 = sadd.s32 %s1798, %s1796
      %s1800 = smul.addr %s1794, 16
      %s1801 = sadd.s32 %s1799, %s1800
      %s1802 = smul.addr %s1801, 8
      %s1803 = scalar_lea.vmem %s5, %s1802
      // Predicated region
      $region37: #{conv_norm_act_pallas.2} parent=35 // pred_check
        %p1804 = pneg %p173
      $region38: #{conv_norm_act_pallas.2} parent=35 // pred_check_branch
        %1806 = sbr.rel (%p1804) target = $region40
      $region39: #{conv_norm_act_pallas.2} parent=35 // pred_region
        %s1807 = smul.u32 32, %s24
      $region40: #{conv_norm_act_pallas.2} parent=35 // pred_fallthru
        _
      // Predicated region
      $region41: #{conv_norm_act_pallas.2} parent=35 // pred_check
        %p1808 = pneg %p203
      $region42: #{conv_norm_act_pallas.2} parent=35 // pred_check_branch
        %1810 = sbr.rel (%p1808) target = $region44
      $region43: #{conv_norm_act_pallas.2} parent=35 // pred_region
        _
      $region44: #{conv_norm_act_pallas.2} parent=35 // pred_fallthru
        _
    $region36: #{conv_norm_act_pallas.2} parent=5 // pred_fallthru
      _
    %p1811 = scmp.le.s32.totalorder 2, %s12
    // Predicated region
    $region45: #{conv_norm_act_pallas.2} parent=5 // pred_check
      %p1812 = pneg %p1811
    $region46: #{conv_norm_act_pallas.2} parent=5 // pred_check_branch
      %1814 = sbr.rel (%p1812) target = $region48
    $region47: #{conv_norm_act_pallas.2} parent=5 // pred_region
      %s1815 = ssub.s32 %s12, 2
      // Predicated region
      $region49: #{conv_norm_act_pallas.2} parent=47 // pred_check
        %p1816 = pneg %p179
      $region50: #{conv_norm_act_pallas.2} parent=47 // pred_check_branch
        %1818 = sbr.rel (%p1816) target = $region52
      $region51: #{conv_norm_act_pallas.2} parent=47 // pred_region
        %s1819 = smul.u32 32, %s27
        %p1820 = scmp.lt.s32.totalorder %s25, 1
        %s1821 = scalar_select %p1820, %s25, 1
        %p1822 = scmp.lt.s32.totalorder %s26, 15
        %s1823 = scalar_select %p1822, %s26, 15
        %p1824 = scmp.lt.s32.totalorder %s1819, 31
        %s1825 = scalar_select %p1824, %s1819, 31
        %s1826 = smul.addr %s1823, 32
        %s1827 = sadd.s32 %s1825, %s1826
        %s1828 = smul.addr %s1821, 512
        %s1829 = sadd.s32 %s1827, %s1828
        %s1830 = smul.addr %s1829, 4
        %s1831 = scalar_lea.vmem %s4, %s1830
      $region52: #{conv_norm_act_pallas.2} parent=47 // pred_fallthru
        _
      // Predicated region
      $region53: #{conv_norm_act_pallas.2} parent=47 // pred_check
        %p1832 = pneg %p209
      $region54: #{conv_norm_act_pallas.2} parent=47 // pred_check_branch
        %1834 = sbr.rel (%p1832) target = $region56
      $region55: #{conv_norm_act_pallas.2} parent=47 // pred_region
        %p1835 = scmp.lt.s32.totalorder %s25, 1
        %s1836 = scalar_select %p1835, %s25, 1
        %p1837 = scmp.lt.s32.totalorder %s26, 15
        %s1838 = scalar_select %p1837, %s26, 15
        %p1839 = scmp.lt.s32.totalorder %s27, 0
        %s1840 = scalar_select %p1839, %s27, 0
        %s1841 = sadd.s32 %s1840, %s1838
        %s1842 = smul.addr %s1836, 16
        %s1843 = sadd.s32 %s1841, %s1842
        %s1844 = smul.addr %s1843, 8
        %s1845 = scalar_lea.vmem %s5, %s1844
      $region56: #{conv_norm_act_pallas.2} parent=47 // pred_fallthru
        _
    $region48: #{conv_norm_act_pallas.2} parent=5 // pred_fallthru
      _
  $region6: #{conv_norm_act_pallas.2} parent=0 // loop_footer
    %s16 = sadd.s32 1, %s12
  $region7: #{conv_norm_act_pallas.2} parent=0 // loop_footer_branch
    %11 = sbr.rel target = $region3
  $region8: #{conv_norm_act_pallas.2} parent=0 // loop_exit
    _

// kernel: conv_norm_act_pallas.3
$region0: #{conv_norm_act_pallas.3}
  #allocation0 [shape = 'u32[]', space=smem, size = 0x4, offset = 0x4, fixed_abs, tag = 'smem constant byte address 0x4 - core index']
  #allocation1 [shape = 'u32[144,128]{1,0:T(1,128)}', space=vmem, size = 0x12000, scoped, tag = 'internal scratch']
  %s0 = inlined_call_operand.vmem [shape: bf16[2,16,256,128], index: 0, kind: input, shape index: {}]
  %s1 = inlined_call_operand.vmem [shape: f32[2,1,1,128], index: 1, kind: input, shape index: {}]
  %s2 = inlined_call_operand.vmem [shape: f32[2,1,1,128], index: 2, kind: input, shape index: {}]
  %s3 = inlined_call_operand.vmem [shape: f32[2,16,256,128], index: 3, kind: output, shape index: {}]
  %s4 = sld [smem:[#allocation0]]
  $region45: #{conv_norm_act_pallas.3} parent=0
    _
  %s6 = ssub.s32 1, %s4
  %s7 = scalar_select 0, %s6, %s4
  loop: start=0, step=1, limit=34
  $region2: #{conv_norm_act_pallas.3} parent=0 // loop_pre_header
    _
  $region3: #{conv_norm_act_pallas.3} parent=0 // loop_header
    %s9 = sphi 0, %s13
    %p10 = scmp.ge.s32.totalorder %s9, 34
    %s16 = sphi 0, %s35
    %s17 = sphi 0, %s31
    %s18 = sphi 0, %s27
    %s19 = sphi 0, %s16
    %s20 = sphi 0, %s17
    %s21 = sphi 0, %s18
    %s22 = sphi 0, %s19
    %s23 = sphi 0, %s20
    %s24 = sphi 0, %s21
    %s42 = sphi 0, %s44
    %s45 = sphi 0, %s42
    %s46 = sphi 0, %s45
    %s62 = sphi 0, %s46
    %s68 = sphi 0, %s70
    %s71 = sphi 0, %s68
    %s72 = sphi 0, %s71
    %s88 = sphi 0, %s72
    %s94 = sphi 0, %s96
    %s97 = sphi 0, %s94
    %s98 = sphi 0, %s97
    %s114 = sphi 0, %s98
    %s124 = sphi 0, %s126
    %s127 = sphi 0, %s124
    %s128 = sphi 0, %s127
    %s144 = sphi 0, %s128
  $region4: #{conv_norm_act_pallas.3} parent=0 // loop_header_branch
    %12 = sbr.rel (%p10) target = $region8
  $region5: #{conv_norm_act_pallas.3} parent=0 // loop_body
    %s14 = ssub.s32 %s9, 1
    %s15 = ssub.s32 %s9, 2
    %s25 = sadd.s32 1, %s18
    %p26 = scmp.ge.s32.totalorder %s25, 1
    %s27 = scalar_select %p26, 0, %s25
    %s28 = sadd.s32 1, %s17
    %s29 = scalar_select %p26, %s28, %s17
    %p30 = scmp.ge.s32.totalorder %s29, 16
    %s31 = scalar_select %p30, 0, %s29
    %s32 = sadd.s32 1, %s16
    %s33 = scalar_select %p30, %s32, %s16
    %p34 = scmp.ge.s32.totalorder %s33, 2
    %s35 = scalar_select %p34, 0, %s33
    %s36 = ssub.s32 %s16, %s35
    %s37 = ssub.s32 %s17, %s31
    %s38 = sor.u32 %s36, %s37
    %s39 = ssub.s32 %s18, %s27
    %s40 = sor.u32 %s38, %s39
    %p41 = scmp.eq.s32.totalorder %s40, 0
    %s43 = sadd.s32 %s42, 1
    %s44 = scalar_select %p41, %s42, %s43
    %p47 = pneg %p41
    %p48 = scmp.eq.s32.totalorder %s9, 31
    %p49 = por %p47, %p48
    %p50 = scmp.ne.s32.totalorder %s42, %s45
    %p51 = scmp.eq.s32.totalorder %s9, 0
    %p52 = por %p50, %p51
    %p53 = scmp.ne.s32.totalorder %s42, %s45
    %p54 = scmp.eq.s32.totalorder %s14, 31
    %p55 = por %p53, %p54
    %p56 = scmp.ne.s32.totalorder %s45, %s46
    %p57 = scmp.eq.s32.totalorder %s14, 0
    %p58 = por %p56, %p57
    %p59 = scmp.ne.s32.totalorder %s45, %s46
    %p60 = scmp.eq.s32.totalorder %s15, 31
    %p61 = por %p59, %p60
    %p63 = scmp.ne.s32.totalorder %s46, %s62
    %p64 = scmp.eq.s32.totalorder %s15, 0
    %p65 = por %p63, %p64
    %s66 = ssub.s32 %s16, %s35
    %p67 = scmp.eq.s32.totalorder %s66, 0
    %s69 = sadd.s32 %s68, 1
    %s70 = scalar_select %p67, %s68, %s69
    %p73 = pneg %p67
    %p74 = scmp.eq.s32.totalorder %s9, 31
    %p75 = por %p73, %p74
    %p76 = scmp.ne.s32.totalorder %s68, %s71
    %p77 = scmp.eq.s32.totalorder %s9, 0
    %p78 = por %p76, %p77
    %p79 = scmp.ne.s32.totalorder %s68, %s71
    %p80 = scmp.eq.s32.totalorder %s14, 31
    %p81 = por %p79, %p80
    %p82 = scmp.ne.s32.totalorder %s71, %s72
    %p83 = scmp.eq.s32.totalorder %s14, 0
    %p84 = por %p82, %p83
    %p85 = scmp.ne.s32.totalorder %s71, %s72
    %p86 = scmp.eq.s32.totalorder %s15, 31
    %p87 = por %p85, %p86
    %p89 = scmp.ne.s32.totalorder %s72, %s88
    %p90 = scmp.eq.s32.totalorder %s15, 0
    %p91 = por %p89, %p90
    %s92 = ssub.s32 %s16, %s35
    %p93 = scmp.eq.s32.totalorder %s92, 0
    %s95 = sadd.s32 %s94, 1
    %s96 = scalar_select %p93, %s94, %s95
    %p99 = pneg %p93
    %p100 = scmp.eq.s32.totalorder %s9, 31
    %p101 = por %p99, %p100
    %p102 = scmp.ne.s32.totalorder %s94, %s97
    %p103 = scmp.eq.s32.totalorder %s9, 0
    %p104 = por %p102, %p103
    %p105 = scmp.ne.s32.totalorder %s94, %s97
    %p106 = scmp.eq.s32.totalorder %s14, 31
    %p107 = por %p105, %p106
    %p108 = scmp.ne.s32.totalorder %s97, %s98
    %p109 = scmp.eq.s32.totalorder %s14, 0
    %p110 = por %p108, %p109
    %p111 = scmp.ne.s32.totalorder %s97, %s98
    %p112 = scmp.eq.s32.totalorder %s15, 31
    %p113 = por %p111, %p112
    %p115 = scmp.ne.s32.totalorder %s98, %s114
    %p116 = scmp.eq.s32.totalorder %s15, 0
    %p117 = por %p115, %p116
    %s118 = ssub.s32 %s16, %s35
    %s119 = ssub.s32 %s17, %s31
    %s120 = sor.u32 %s118, %s119
    %s121 = ssub.s32 %s18, %s27
    %s122 = sor.u32 %s120, %s121
    %p123 = scmp.eq.s32.totalorder %s122, 0
    %s125 = sadd.s32 %s124, 1
    %s126 = scalar_select %p123, %s124, %s125
    %p129 = pneg %p123
    %p130 = scmp.eq.s32.totalorder %s9, 31
    %p131 = por %p129, %p130
    %p132 = scmp.ne.s32.totalorder %s124, %s127
    %p133 = scmp.eq.s32.totalorder %s9, 0
    %p134 = por %p132, %p133
    %p135 = scmp.ne.s32.totalorder %s124, %s127
    %p136 = scmp.eq.s32.totalorder %s14, 31
    %p137 = por %p135, %p136
    %p138 = scmp.ne.s32.totalorder %s127, %s128
    %p139 = scmp.eq.s32.totalorder %s14, 0
    %p140 = por %p138, %p139
    %p141 = scmp.ne.s32.totalorder %s127, %s128
    %p142 = scmp.eq.s32.totalorder %s15, 31
    %p143 = por %p141, %p142
    %p145 = scmp.ne.s32.totalorder %s128, %s144
    %p146 = scmp.eq.s32.totalorder %s15, 0
    %p147 = por %p145, %p146
    %p148 = scmp.le.s32.totalorder 1, %s9
    %p149 = scmp.lt.s32.totalorder %s9, 33
    %p150 = pnand %p148, %p149
    %p151 = pneg %p150
    // Predicated region
    $region9: #{conv_norm_act_pallas.3} parent=5 // pred_check
      _
    $region10: #{conv_norm_act_pallas.3} parent=5 // pred_check_branch
      %153 = sbr.rel (%p150) target = $region12
    $region11: #{conv_norm_act_pallas.3} parent=5 // pred_region
      %s154 = ssub.s32 %s9, 1
    $region12: #{conv_norm_act_pallas.3} parent=5 // pred_fallthru
      _
    %p155 = scmp.lt.s32.totalorder %s9, 32
    // Predicated region
    $region13: #{conv_norm_act_pallas.3} parent=5 // pred_check
      %p156 = pneg %p155
    $region14: #{conv_norm_act_pallas.3} parent=5 // pred_check_branch
      %158 = sbr.rel (%p156) target = $region16
    $region15: #{conv_norm_act_pallas.3} parent=5 // pred_region
      // Predicated region
      $region17: #{conv_norm_act_pallas.3} parent=15 // pred_check
        %p159 = pneg %p52
      $region18: #{conv_norm_act_pallas.3} parent=15 // pred_check_branch
        %161 = sbr.rel (%p159) target = $region20
      $region19: #{conv_norm_act_pallas.3} parent=15 // pred_region
        %s162 = smul.u32 32, %s18
        %p163 = scmp.lt.s32.totalorder %s16, 1
        %s164 = scalar_select %p163, %s16, 1
        %p165 = scmp.lt.s32.totalorder %s17, 15
        %s166 = scalar_select %p165, %s17, 15
        %p167 = scmp.lt.s32.totalorder %s162, 31
        %s168 = scalar_select %p167, %s162, 31
        %s169 = smul.addr %s166, 32
        %s170 = sadd.s32 %s168, %s169
        %s171 = smul.addr %s164, 512
        %s172 = sadd.s32 %s170, %s171
        %s173 = smul.addr %s172, 4
        %s174 = scalar_lea.vmem %s0, %s173
        %s175 = smul.u32 32, %s18
      $region20: #{conv_norm_act_pallas.3} parent=15 // pred_fallthru
        _
      // Predicated region
      $region21: #{conv_norm_act_pallas.3} parent=15 // pred_check
        %p176 = pneg %p78
      $region22: #{conv_norm_act_pallas.3} parent=15 // pred_check_branch
        %178 = sbr.rel (%p176) target = $region24
      $region23: #{conv_norm_act_pallas.3} parent=15 // pred_region
        %p179 = scmp.lt.s32.totalorder %s16, 1
        %s180 = scalar_select %p179, %s16, 1
        %s181 = scalar_lea.vmem %s1, %s180
      $region24: #{conv_norm_act_pallas.3} parent=15 // pred_fallthru
        _
      // Predicated region
      $region25: #{conv_norm_act_pallas.3} parent=15 // pred_check
        %p182 = pneg %p104
      $region26: #{conv_norm_act_pallas.3} parent=15 // pred_check_branch
        %184 = sbr.rel (%p182) target = $region28
      $region27: #{conv_norm_act_pallas.3} parent=15 // pred_region
        %p185 = scmp.lt.s32.totalorder %s16, 1
        %s186 = scalar_select %p185, %s16, 1
        %s187 = scalar_lea.vmem %s2, %s186
      $region28: #{conv_norm_act_pallas.3} parent=15 // pred_fallthru
        _
    $region16: #{conv_norm_act_pallas.3} parent=5 // pred_fallthru
      _
    %p188 = scmp.le.s32.totalorder 1, %s9
    %p189 = scmp.lt.s32.totalorder %s9, 33
    %p190 = pnand %p188, %p189
    %p191 = pneg %p190
    // Predicated region
    $region29: #{conv_norm_act_pallas.3} parent=5 // pred_check
      _
    $region30: #{conv_norm_act_pallas.3} parent=5 // pred_check_branch
      %193 = sbr.rel (%p190) target = $region32
    $region31: #{conv_norm_act_pallas.3} parent=5 // pred_region
      %s194 = ssub.s32 %s9, 1
      %s195 = smul.u32 32, %s21
      %p196 = scmp.lt.s32.totalorder %s19, 1
      %s197 = scalar_select %p196, %s19, 1
      %p198 = scmp.lt.s32.totalorder %s20, 15
      %s199 = scalar_select %p198, %s20, 15
      %p200 = scmp.lt.s32.totalorder %s195, 31
      %s201 = scalar_select %p200, %s195, 31
      %s202 = smul.addr %s199, 32
      %s203 = sadd.s32 %s201, %s202
      %s204 = smul.addr %s197, 512
      %s205 = sadd.s32 %s203, %s204
      %s206 = smul.addr %s205, 4
      %s207 = scalar_lea.vmem %s0, %s206
      %p208 = pneg %p58
      %p209 = pneg %p55
      %p210 = scmp.lt.s32.totalorder %s19, 1
      %s211 = scalar_select %p210, %s19, 1
      %s212 = scalar_lea.vmem %s1, %s211
      %p213 = pneg %p84
      %p214 = pneg %p81
      %p215 = scmp.lt.s32.totalorder %s19, 1
      %s216 = scalar_select %p215, %s19, 1
      %s217 = scalar_lea.vmem %s2, %s216
      %p218 = pneg %p110
      %p219 = pneg %p107
      %p220 = pneg %p140
      %p221 = pneg %p137
      %s222 = smul.u32 32, %s21
      %p223 = scmp.lt.s32.totalorder %s19, 1
      %s224 = scalar_select %p223, %s19, 1
      %p225 = scmp.lt.s32.totalorder %s20, 15
      %s226 = scalar_select %p225, %s20, 15
      %p227 = scmp.lt.s32.totalorder %s222, 31
      %s228 = scalar_select %p227, %s222, 31
      %s229 = smul.addr %s226, 32
      %s230 = sadd.s32 %s228, %s229
      %s231 = smul.addr %s224, 512
      %s232 = sadd.s32 %s230, %s231
      %s233 = smul.addr %s232, 8
      %s234 = scalar_lea.vmem %s3, %s233
      %s235 = smul.u32 32, %s21
      %p236 = scmp.lt.s32.totalorder %s19, 1
      %s237 = scalar_select %p236, %s19, 1
      %p238 = scmp.lt.s32.totalorder %s20, 15
      %s239 = scalar_select %p238, %s20, 15
      %p240 = scmp.lt.s32.totalorder %s235, 31
      %s241 = scalar_select %p240, %s235, 31
      %s242 = smul.addr %s239, 32
      %s243 = sadd.s32 %s241, %s242
      %s244 = smul.addr %s237, 512
      %s245 = sadd.s32 %s243, %s244
      %s246 = smul.addr %s245, 4
      %s247 = scalar_lea.vmem %s0, %s246
      %s248 = smul.u32 32, %s21
      %p249 = scmp.lt.s32.totalorder %s19, 1
      %s250 = scalar_select %p249, %s19, 1
      %s251 = scalar_lea.vmem %s1, %s250
      %p252 = scmp.lt.s32.totalorder %s19, 1
      %s253 = scalar_select %p252, %s19, 1
      %s254 = scalar_lea.vmem %s2, %s253
      %s255 = smul.u32 32, %s21
      %p256 = scmp.lt.s32.totalorder %s19, 1
      %s257 = scalar_select %p256, %s19, 1
      %p258 = scmp.lt.s32.totalorder %s20, 15
      %s259 = scalar_select %p258, %s20, 15
      %p260 = scmp.lt.s32.totalorder %s255, 31
      %s261 = scalar_select %p260, %s255, 31
      %s262 = smul.addr %s259, 32
      %s263 = sadd.s32 %s261, %s262
      %s264 = smul.addr %s257, 512
      %s265 = sadd.s32 %s263, %s264
      %s266 = smul.addr %s265, 8
      %s267 = scalar_lea.vmem %s3, %s266
      %s268 = smul.u32 32, %s21
      %v269 = vld [vmem:[%s247] sm:$0xf]
      %v270 = vld [vmem:[%s247 + $0x4] sm:$0xf]
      %v271 = vld [vmem:[%s247 + $0x8] sm:$0xf]
      %v272 = vld [vmem:[%s247 + $0xc] sm:$0xf]
      %v273 = vld [vmem:[%s247 + $0x10] sm:$0xf]
      %v274 = vld [vmem:[%s247 + $0x14] sm:$0xf]
      %v275 = vld [vmem:[%s247 + $0x18] sm:$0xf]
      %v276 = vld [vmem:[%s247 + $0x1c] sm:$0xf]
      %v277 = vld [vmem:[%s247 + $0x20] sm:$0xf]
      %v278 = vld [vmem:[%s247 + $0x24] sm:$0xf]
      %v279 = vld [vmem:[%s247 + $0x28] sm:$0xf]
      %v280 = vld [vmem:[%s247 + $0x2c] sm:$0xf]
      %v281 = vld [vmem:[%s247 + $0x30] sm:$0xf]
      %v282 = vld [vmem:[%s247 + $0x34] sm:$0xf]
      %v283 = vld [vmem:[%s247 + $0x38] sm:$0xf]
      %v284 = vld [vmem:[%s247 + $0x3c] sm:$0xf]
      %v285 = vld [vmem:[%s247 + $0x40] sm:$0xf]
      %v286 = vld [vmem:[%s247 + $0x44] sm:$0xf]
      %v287 = vld [vmem:[%s247 + $0x48] sm:$0xf]
      %v288 = vld [vmem:[%s247 + $0x4c] sm:$0xf]
      %v289 = vld [vmem:[%s247 + $0x50] sm:$0xf]
      %v290 = vld [vmem:[%s247 + $0x54] sm:$0xf]
      %v291 = vld [vmem:[%s247 + $0x58] sm:$0xf]
      %v292 = vld [vmem:[%s247 + $0x5c] sm:$0xf]
      %v293 = vld [vmem:[%s247 + $0x60] sm:$0xf]
      %v294 = vld [vmem:[%s247 + $0x64] sm:$0xf]
      %v295 = vld [vmem:[%s247 + $0x68] sm:$0xf]
      %v296 = vld [vmem:[%s247 + $0x6c] sm:$0xf]
      %v297 = vld [vmem:[%s247 + $0x70] sm:$0xf]
      %v298 = vld [vmem:[%s247 + $0x74] sm:$0xf]
      %v299 = vld [vmem:[%s247 + $0x78] sm:$0xf]
      %v300 = vld [vmem:[%s247 + $0x7c] sm:$0xf]
      %v301 = vunpack.c.l.bf16 %v269
      %v302 = vunpack.c.l.bf16 %v270
      %v303 = vunpack.c.l.bf16 %v271
      %v304 = vunpack.c.l.bf16 %v272
      %v305 = vunpack.c.l.bf16 %v273
      %v306 = vunpack.c.l.bf16 %v274
      %v307 = vunpack.c.l.bf16 %v275
      %v308 = vunpack.c.l.bf16 %v276
      %v309 = vunpack.c.l.bf16 %v277
      %v310 = vunpack.c.l.bf16 %v278
      %v311 = vunpack.c.l.bf16 %v279
      %v312 = vunpack.c.l.bf16 %v280
      %v313 = vunpack.c.l.bf16 %v281
      %v314 = vunpack.c.l.bf16 %v282
      %v315 = vunpack.c.l.bf16 %v283
      %v316 = vunpack.c.l.bf16 %v284
      %v317 = vunpack.c.l.bf16 %v285
      %v318 = vunpack.c.l.bf16 %v286
      %v319 = vunpack.c.l.bf16 %v287
      %v320 = vunpack.c.l.bf16 %v288
      %v321 = vunpack.c.l.bf16 %v289
      %v322 = vunpack.c.l.bf16 %v290
      %v323 = vunpack.c.l.bf16 %v291
      %v324 = vunpack.c.l.bf16 %v292
      %v325 = vunpack.c.l.bf16 %v293
      %v326 = vunpack.c.l.bf16 %v294
      %v327 = vunpack.c.l.bf16 %v295
      %v328 = vunpack.c.l.bf16 %v296
      %v329 = vunpack.c.l.bf16 %v297
      %v330 = vunpack.c.l.bf16 %v298
      %v331 = vunpack.c.l.bf16 %v299
      %v332 = vunpack.c.l.bf16 %v300
      %v333 = vld [vmem:[%s251] sm:$0x1]
      %v335 = vlaneseq
      %v336 = vshrl.u32 %v335, 7
      %v337 = vsub.s32 0, %v336
      %v338 = vrot.slane %v333, %v337
      %v340 = vmul.f32 %v301, %v338
      %v341 = vmul.f32 %v302, %v338
      %v342 = vmul.f32 %v303, %v338
      %v343 = vmul.f32 %v304, %v338
      %v344 = vmul.f32 %v305, %v338
      %v345 = vmul.f32 %v306, %v338
      %v346 = vmul.f32 %v307, %v338
      %v347 = vmul.f32 %v308, %v338
      %v348 = vmul.f32 %v309, %v338
      %v349 = vmul.f32 %v310, %v338
      %v350 = vmul.f32 %v311, %v338
      %v351 = vmul.f32 %v312, %v338
      %v352 = vmul.f32 %v313, %v338
      %v353 = vmul.f32 %v314, %v338
      %v354 = vmul.f32 %v315, %v338
      %v355 = vmul.f32 %v316, %v338
      %v356 = vmul.f32 %v317, %v338
      %v357 = vmul.f32 %v318, %v338
      %v358 = vmul.f32 %v319, %v338
      %v359 = vmul.f32 %v320, %v338
      %v360 = vmul.f32 %v321, %v338
      %v361 = vmul.f32 %v322, %v338
      %v362 = vmul.f32 %v323, %v338
      %v363 = vmul.f32 %v324, %v338
      %v364 = vmul.f32 %v325, %v338
      %v365 = vmul.f32 %v326, %v338
      %v366 = vmul.f32 %v327, %v338
      %v367 = vmul.f32 %v328, %v338
      %v368 = vmul.f32 %v329, %v338
      %v369 = vmul.f32 %v330, %v338
      %v370 = vmul.f32 %v331, %v338
      %v371 = vmul.f32 %v332, %v338
      %v372 = vld [vmem:[%s254] sm:$0x1]
      %v374 = vlaneseq
      %v375 = vshrl.u32 %v374, 7
      %v376 = vsub.s32 0, %v375
      %v377 = vrot.slane %v372, %v376
      %v379 = vadd.f32 %v340, %v377
      %v380 = vadd.f32 %v341, %v377
      %v381 = vadd.f32 %v342, %v377
      %v382 = vadd.f32 %v343, %v377
      %v383 = vadd.f32 %v344, %v377
      %v384 = vadd.f32 %v345, %v377
      %v385 = vadd.f32 %v346, %v377
      %v386 = vadd.f32 %v347, %v377
      %v387 = vadd.f32 %v348, %v377
      %v388 = vadd.f32 %v349, %v377
      %v389 = vadd.f32 %v350, %v377
      %v390 = vadd.f32 %v351, %v377
      %v391 = vadd.f32 %v352, %v377
      %v392 = vadd.f32 %v353, %v377
      %v393 = vadd.f32 %v354, %v377
      %v394 = vadd.f32 %v355, %v377
      %v395 = vadd.f32 %v356, %v377
      %v396 = vadd.f32 %v357, %v377
      %v397 = vadd.f32 %v358, %v377
      %v398 = vadd.f32 %v359, %v377
      %v399 = vadd.f32 %v360, %v377
      %v400 = vadd.f32 %v361, %v377
      %v401 = vadd.f32 %v362, %v377
      %v402 = vadd.f32 %v363, %v377
      %v403 = vadd.f32 %v364, %v377
      %v404 = vadd.f32 %v365, %v377
      %v405 = vadd.f32 %v366, %v377
      %v406 = vadd.f32 %v367, %v377
      %v407 = vadd.f32 %v368, %v377
      %v408 = vadd.f32 %v369, %v377
      %v409 = vadd.f32 %v370, %v377
      %v410 = vadd.f32 %v371, %v377
      %vm411 = vcmp.ge.f32.partialorder %v379, 0.0
      %vm412 = vcmp.ge.f32.partialorder %v380, 0.0
      %vm413 = vcmp.ge.f32.partialorder %v381, 0.0
      %vm414 = vcmp.ge.f32.partialorder %v382, 0.0
      %vm415 = vcmp.ge.f32.partialorder %v383, 0.0
      %vm416 = vcmp.ge.f32.partialorder %v384, 0.0
      %vm417 = vcmp.ge.f32.partialorder %v385, 0.0
      %vm418 = vcmp.ge.f32.partialorder %v386, 0.0
      %vm419 = vcmp.ge.f32.partialorder %v387, 0.0
      %vm420 = vcmp.ge.f32.partialorder %v388, 0.0
      %vm421 = vcmp.ge.f32.partialorder %v389, 0.0
      %vm422 = vcmp.ge.f32.partialorder %v390, 0.0
      %vm423 = vcmp.ge.f32.partialorder %v391, 0.0
      %vm424 = vcmp.ge.f32.partialorder %v392, 0.0
      %vm425 = vcmp.ge.f32.partialorder %v393, 0.0
      %vm426 = vcmp.ge.f32.partialorder %v394, 0.0
      %vm427 = vcmp.ge.f32.partialorder %v395, 0.0
      %vm428 = vcmp.ge.f32.partialorder %v396, 0.0
      %vm429 = vcmp.ge.f32.partialorder %v397, 0.0
      %vm430 = vcmp.ge.f32.partialorder %v398, 0.0
      %vm431 = vcmp.ge.f32.partialorder %v399, 0.0
      %vm432 = vcmp.ge.f32.partialorder %v400, 0.0
      %vm433 = vcmp.ge.f32.partialorder %v401, 0.0
      %vm434 = vcmp.ge.f32.partialorder %v402, 0.0
      %vm435 = vcmp.ge.f32.partialorder %v403, 0.0
      %vm436 = vcmp.ge.f32.partialorder %v404, 0.0
      %vm437 = vcmp.ge.f32.partialorder %v405, 0.0
      %vm438 = vcmp.ge.f32.partialorder %v406, 0.0
      %vm439 = vcmp.ge.f32.partialorder %v407, 0.0
      %vm440 = vcmp.ge.f32.partialorder %v408, 0.0
      %vm441 = vcmp.ge.f32.partialorder %v409, 0.0
      %vm442 = vcmp.ge.f32.partialorder %v410, 0.0
      %v443 = vmul.f32 %v379, 0.1
      %v444 = vmul.f32 %v380, 0.1
      %v445 = vmul.f32 %v381, 0.1
      %v446 = vmul.f32 %v382, 0.1
      %v447 = vmul.f32 %v383, 0.1
      %v448 = vmul.f32 %v384, 0.1
      %v449 = vmul.f32 %v385, 0.1
      %v450 = vmul.f32 %v386, 0.1
      %v451 = vmul.f32 %v387, 0.1
      %v452 = vmul.f32 %v388, 0.1
      %v453 = vmul.f32 %v389, 0.1
      %v454 = vmul.f32 %v390, 0.1
      %v455 = vmul.f32 %v391, 0.1
      %v456 = vmul.f32 %v392, 0.1
      %v457 = vmul.f32 %v393, 0.1
      %v458 = vmul.f32 %v394, 0.1
      %v459 = vmul.f32 %v395, 0.1
      %v460 = vmul.f32 %v396, 0.1
      %v461 = vmul.f32 %v397, 0.1
      %v462 = vmul.f32 %v398, 0.1
      %v463 = vmul.f32 %v399, 0.1
      %v464 = vmul.f32 %v400, 0.1
      %v465 = vmul.f32 %v401, 0.1
      %v466 = vmul.f32 %v402, 0.1
      %v467 = vmul.f32 %v403, 0.1
      %v468 = vmul.f32 %v404, 0.1
      %v469 = vmul.f32 %v405, 0.1
      %v470 = vmul.f32 %v406, 0.1
      %v471 = vmul.f32 %v407, 0.1
      %v472 = vmul.f32 %v408, 0.1
      %v473 = vmul.f32 %v409, 0.1
      %v474 = vmul.f32 %v410, 0.1
      %v475 = vsel %vm411, %v379, %v443
      %v476 = vsel %vm412, %v380, %v444
      %v477 = vsel %vm413, %v381, %v445
      %v478 = vsel %vm414, %v382, %v446
      %v479 = vsel %vm415, %v383, %v447
      %v480 = vsel %vm416, %v384, %v448
      %v481 = vsel %vm417, %v385, %v449
      %v482 = vsel %vm418, %v386, %v450
      %v483 = vsel %vm419, %v387, %v451
      %v484 = vsel %vm420, %v388, %v452
      %v485 = vsel %vm421, %v389, %v453
      %v486 = vsel %vm422, %v390, %v454
      %v487 = vsel %vm423, %v391, %v455
      %v488 = vsel %vm424, %v392, %v456
      %v489 = vsel %vm425, %v393, %v457
      %v490 = vsel %vm426, %v394, %v458
      %v491 = vsel %vm427, %v395, %v459
      %v492 = vsel %vm428, %v396, %v460
      %v493 = vsel %vm429, %v397, %v461
      %v494 = vsel %vm430, %v398, %v462
      %v495 = vsel %vm431, %v399, %v463
      %v496 = vsel %vm432, %v400, %v464
      %v497 = vsel %vm433, %v401, %v465
      %v498 = vsel %vm434, %v402, %v466
      %v499 = vsel %vm435, %v403, %v467
      %v500 = vsel %vm436, %v404, %v468
      %v501 = vsel %vm437, %v405, %v469
      %v502 = vsel %vm438, %v406, %v470
      %v503 = vsel %vm439, %v407, %v471
      %v504 = vsel %vm440, %v408, %v472
      %v505 = vsel %vm441, %v409, %v473
      %v506 = vsel %vm442, %v410, %v474
      %507 = vst [vmem:[%s267] sm:$0xff] %v475
      %508 = vst [vmem:[%s267 + $0x8] sm:$0xff] %v476
      %509 = vst [vmem:[%s267 + $0x10] sm:$0xff] %v477
      %510 = vst [vmem:[%s267 + $0x18] sm:$0xff] %v478
      %511 = vst [vmem:[%s267 + $0x20] sm:$0xff] %v479
      %512 = vst [vmem:[%s267 + $0x28] sm:$0xff] %v480
      %513 = vst [vmem:[%s267 + $0x30] sm:$0xff] %v481
      %514 = vst [vmem:[%s267 + $0x38] sm:$0xff] %v482
      %515 = vst [vmem:[%s267 + $0x40] sm:$0xff] %v483
      %516 = vst [vmem:[%s267 + $0x48] sm:$0xff] %v484
      %517 = vst [vmem:[%s267 + $0x50] sm:$0xff] %v485
      %518 = vst [vmem:[%s267 + $0x58] sm:$0xff] %v486
      %519 = vst [vmem:[%s267 + $0x60] sm:$0xff] %v487
      %520 = vst [vmem:[%s267 + $0x68] sm:$0xff] %v488
      %521 = vst [vmem:[%s267 + $0x70] sm:$0xff] %v489
      %522 = vst [vmem:[%s267 + $0x78] sm:$0xff] %v490
      %523 = vst [vmem:[%s267 + $0x80] sm:$0xff] %v491
      %524 = vst [vmem:[%s267 + $0x88] sm:$0xff] %v492
      %525 = vst [vmem:[%s267 + $0x90] sm:$0xff] %v493
      %526 = vst [vmem:[%s267 + $0x98] sm:$0xff] %v494
      %527 = vst [vmem:[%s267 + $0xa0] sm:$0xff] %v495
      %528 = vst [vmem:[%s267 + $0xa8] sm:$0xff] %v496
      %529 = vst [vmem:[%s267 + $0xb0] sm:$0xff] %v497
      %530 = vst [vmem:[%s267 + $0xb8] sm:$0xff] %v498
      %531 = vst [vmem:[%s267 + $0xc0] sm:$0xff] %v499
      %532 = vst [vmem:[%s267 + $0xc8] sm:$0xff] %v500
      %533 = vst [vmem:[%s267 + $0xd0] sm:$0xff] %v501
      %534 = vst [vmem:[%s267 + $0xd8] sm:$0xff] %v502
      %535 = vst [vmem:[%s267 + $0xe0] sm:$0xff] %v503
      %536 = vst [vmem:[%s267 + $0xe8] sm:$0xff] %v504
      %537 = vst [vmem:[%s267 + $0xf0] sm:$0xff] %v505
      %538 = vst [vmem:[%s267 + $0xf8] sm:$0xff] %v506
      %s539 = smul.u32 32, %s21
      %p540 = scmp.lt.s32.totalorder %s19, 1
      %s541 = scalar_select %p540, %s19, 1
      %p542 = scmp.lt.s32.totalorder %s20, 15
      %s543 = scalar_select %p542, %s20, 15
      %p544 = scmp.lt.s32.totalorder %s539, 31
      %s545 = scalar_select %p544, %s539, 31
      %s546 = smul.addr %s543, 32
      %s547 = sadd.s32 %s545, %s546
      %s548 = smul.addr %s541, 512
      %s549 = sadd.s32 %s547, %s548
      %s550 = smul.addr %s549, 8
      %s551 = scalar_lea.vmem %s3, %s550
      // Predicated region
      $region33: #{conv_norm_act_pallas.3} parent=31 // pred_check
        %p552 = pneg %p137
      $region34: #{conv_norm_act_pallas.3} parent=31 // pred_check_branch
        %554 = sbr.rel (%p552) target = $region36
      $region35: #{conv_norm_act_pallas.3} parent=31 // pred_region
        %s555 = smul.u32 32, %s21
      $region36: #{conv_norm_act_pallas.3} parent=31 // pred_fallthru
        _
    $region32: #{conv_norm_act_pallas.3} parent=5 // pred_fallthru
      _
    %p556 = scmp.le.s32.totalorder 2, %s9
    // Predicated region
    $region37: #{conv_norm_act_pallas.3} parent=5 // pred_check
      %p557 = pneg %p556
    $region38: #{conv_norm_act_pallas.3} parent=5 // pred_check_branch
      %559 = sbr.rel (%p557) target = $region40
    $region39: #{conv_norm_act_pallas.3} parent=5 // pred_region
      %s560 = ssub.s32 %s9, 2
      // Predicated region
      $region41: #{conv_norm_act_pallas.3} parent=39 // pred_check
        %p561 = pneg %p143
      $region42: #{conv_norm_act_pallas.3} parent=39 // pred_check_branch
        %563 = sbr.rel (%p561) target = $region44
      $region43: #{conv_norm_act_pallas.3} parent=39 // pred_region
        %s564 = smul.u32 32, %s24
        %p565 = scmp.lt.s32.totalorder %s22, 1
        %s566 = scalar_select %p565, %s22, 1
        %p567 = scmp.lt.s32.totalorder %s23, 15
        %s568 = scalar_select %p567, %s23, 15
        %p569 = scmp.lt.s32.totalorder %s564, 31
        %s570 = scalar_select %p569, %s564, 31
        %s571 = smul.addr %s568, 32
        %s572 = sadd.s32 %s570, %s571
        %s573 = smul.addr %s566, 512
        %s574 = sadd.s32 %s572, %s573
        %s575 = smul.addr %s574, 8
        %s576 = scalar_lea.vmem %s3, %s575
      $region44: #{conv_norm_act_pallas.3} parent=39 // pred_fallthru
        _
    $region40: #{conv_norm_act_pallas.3} parent=5 // pred_fallthru
      _
  $region6: #{conv_norm_act_pallas.3} parent=0 // loop_footer
    %s13 = sadd.s32 1, %s9
  $region7: #{conv_norm_act_pallas.3} parent=0 // loop_footer_branch
    %8 = sbr.rel target = $region3
  $region8: #{conv_norm_act_pallas.3} parent=0 // loop_exit
    _

</llo_original>
